<compile_context>
chip_gen: v5e
topology: v5e:2x2
jax: 0.10.0
libtpu: 0.0.40
codegen_flags: <defaults>
</compile_context>

<pallas_src>
import functools

import jax
import jax.numpy as jnp
from jax.experimental import pallas as pl
from jax.experimental.pallas import tpu as pltpu


def _leaky_relu(x, slope=0.2):
    # For 0 < slope < 1, max(x, slope*x) == leaky_relu(x, slope):
    # mul + max (2 VALU ops) instead of cmp + select + mul (3).
    return jnp.maximum(x, slope * x)


def mine1_kernel(noise_ref, sample_ref,
                 w1n_ref, w1s_ref, b1_ref,
                 w2_ref, b2_ref,
                 w3_ref, b3_ref,
                 out_ref, *, fc3_as_reduce):
    f32 = jnp.float32

    def mxu_in(x):
        # Activations may already be bf16 (preferred: halves the dominant HBM
        # stream); only cast in-register when the caller handed us f32.
        return x if x.dtype == jnp.bfloat16 else x.astype(jnp.bfloat16)

    # fc1: two bias-free linears (bf16 MXU inputs, f32 accumulate) + shared bias.
    h = jnp.dot(mxu_in(noise_ref[...]), w1n_ref[...], preferred_element_type=f32)
    h = h + jnp.dot(mxu_in(sample_ref[...]), w1s_ref[...],
                    preferred_element_type=f32)
    h = _leaky_relu(h + b1_ref[...])

    # fc2
    h = _leaky_relu(
        jnp.dot(h.astype(jnp.bfloat16), w2_ref[...], preferred_element_type=f32)
        + b2_ref[...])

    # fc3
    if fc3_as_reduce:
        # output_size == 1: an (H, 1) matmul wastes >99% of an MXU pass, so do
        # the projection as a broadcast-multiply + lane reduction (f32, XLU).
        y = jnp.sum(h * w3_ref[...], axis=-1, keepdims=True)
    else:
        y = jnp.dot(h.astype(jnp.bfloat16), w3_ref[...],
                    preferred_element_type=f32)
    out_ref[...] = _leaky_relu(y + b3_ref[...]).astype(out_ref.dtype)


def _tpu_info():
    """(tensorcores_per_chip, default_scoped_vmem_bytes, physical_vmem_bytes).

    Trace-time query with conservative fallbacks (works in interpret mode)."""
    kind = ""
    try:
        kind = jax.devices()[0].device_kind.lower()
    except Exception:
        pass
    is_v7 = "v7" in kind
    tensorcores = 2 if is_v7 else 1
    physical = (64 << 20) if is_v7 else (128 << 20)   # per-TensorCore VMEM
    try:
        physical = min(physical, int(pltpu.get_tpu_info().vmem_capacity_bytes))
    except Exception:
        pass
    default_scoped = (16 << 20) if "v5" in kind else (32 << 20)
    return tensorcores, default_scoped, physical


@functools.partial(jax.jit, static_argnames=("block_b",))
def mine1_forward(noise, sample, prepared_params, block_b=None):
    """Forward pass.  `prepared_params` must come from `prepare_params` so the
    hot path launches no cast/reshape kernels.

    noise: (B, noise_size), sample: (B, sample_size) -> (B, output_size) f32.
    Activations may be f32 or bf16 (pass bf16 from the producer if possible).
    """
    w1n, w1s, b1, w2, b2, w3, b3 = prepared_params
    B, Nn = noise.shape
    Ns = sample.shape[1]
    H = w1n.shape[1]
    O = b3.shape[-1]
    fc3_as_reduce = (O == 1)
    if fc3_as_reduce and w3.shape != (1, H):
        raise ValueError("params must be converted with prepare_params() first")

    tensorcores, default_scoped_vmem, physical_vmem = _tpu_info()

    # ---- batch tile / grid selection (static, trace-time) ------------------
    def _round8_up(x):
        return ((x + 7) // 8) * 8

    if block_b is not None:
        bb = min(block_b, B)
    elif tensorcores >= 2 and B >= 16:
        # v7x: guarantee >=2 grid steps so the "parallel" axis shards the
        # batch across both TensorCores.
        bb = min(B, _round8_up(-(-B // 2)))
    else:
        # Single-TC (v5e/v6e): the grid is a serial loop, so a single
        # full-batch tile avoids paying ~0.35us/step on a us-scale kernel.
        bb = B
    if bb < B:
        bb = max(8, (bb // 8) * 8)   # sublane alignment for partial tiles

    # Shrink the tile if the per-step footprint (double-buffered activation /
    # output tiles + resident weights + f32 intermediates) would blow past
    # 75% of physical VMEM (48 MiB budget on v7x, 96 MiB on v5e/v6e).
    weight_bytes = sum(int(p.size) * p.dtype.itemsize for p in prepared_params)
    act_row_bytes = noise.dtype.itemsize * Nn + sample.dtype.itemsize * Ns

    def est_vmem(tile):
        return (2 * tile * act_row_bytes      # double-buffered input tiles
                + 2 * tile * O * 4            # double-buffered output tile
                + 2 * weight_bytes            # resident (double-buffered) weights
                + 4 * tile * H * 4)           # f32 intermediates headroom

    budget = (physical_vmem * 3) // 4
    while est_vmem(bb) > budget and bb > 8:
        bb = max(8, ((bb // 2) // 8) * 8)

    grid = (pl.cdiv(B, bb),)
    # NOTE: if B % bb != 0 the padded rows of the last input block hold
    # unspecified data.  That is safe only because rows are independent and
    # Pallas drops the out-of-range part of the output writeback -- do not
    # rely on this if a batch-wide reduction is ever added to this kernel.

    # Raise the scoped-VMEM limit only when the estimate approaches the
    # generation default (16 MiB on v5e, 32 MiB on v6e/v7x); cap at budget.
    vmem_limit = None
    if est_vmem(bb) > (default_scoped_vmem * 3) // 4:
        vmem_limit = int(min(est_vmem(bb) * 2, budget))

    # Advisory cost estimate so XLA schedules surrounding ops sensibly.
    flops = 2 * B * ((Nn + Ns) * H + H * H + H * O)
    bytes_accessed = B * act_row_bytes + 4 * B * O + weight_bytes
    cost = pl.CostEstimate(flops=flops, transcendentals=0,
                           bytes_accessed=bytes_accessed)

    kernel = functools.partial(mine1_kernel, fc3_as_reduce=fc3_as_reduce)

    w3_spec = (pl.BlockSpec((1, H), lambda i: (0, 0)) if fc3_as_reduce
               else pl.BlockSpec((H, O), lambda i: (0, 0)))

    return pl.pallas_call(
        kernel,
        out_shape=jax.ShapeDtypeStruct((B, O), jnp.float32),
        grid_spec=pltpu.PrefetchScalarGridSpec(
            num_scalar_prefetch=0,
            grid=grid,
            in_specs=[
                # batch-tiled activations (dtype passes through; cast in-kernel)
                pl.BlockSpec((bb, Nn), lambda i: (i, 0)),
                pl.BlockSpec((bb, Ns), lambda i: (i, 0)),
                # weights / biases are grid-invariant (constant index_map ->
                # DMA'd once and held in VMEM across all batch tiles)
                pl.BlockSpec((Nn, H), lambda i: (0, 0)),
                pl.BlockSpec((Ns, H), lambda i: (0, 0)),
                pl.BlockSpec((1, H), lambda i: (0, 0)),
                pl.BlockSpec((H, H), lambda i: (0, 0)),
                pl.BlockSpec((1, H), lambda i: (0, 0)),
                w3_spec,
                pl.BlockSpec((1, O), lambda i: (0, 0)),
            ],
            out_specs=pl.BlockSpec((bb, O), lambda i: (i, 0)),
        ),
        compiler_params=pltpu.CompilerParams(
            dimension_semantics=("parallel",),
            vmem_limit_bytes=vmem_limit),
        cost_estimate=cost,
    )(noise, sample, w1n, w1s, b1, w2, b2, w3, b3)


def init_params(key, noise_size, sample_size, hidden_size, output_size):
    """Kaiming-normal (fan_in, gain=sqrt(2)) weights, zero biases.

    Returns f32 params pre-transposed to (in_features, out_features), i.e. the
    mathematical layout of the PyTorch module (which stores (out, in))."""
    k1, k2, k3, k4 = jax.random.split(key, 4)

    def kaiming(k, fan_in, fan_out):
        std = jnp.sqrt(2.0 / fan_in)
        # PyTorch weight is (out, in); sample then transpose to (in, out).
        return (std * jax.random.normal(k, (fan_out, fan_in), jnp.float32)).T

    w1n = kaiming(k1, noise_size, hidden_size)
    w1s = kaiming(k2, sample_size, hidden_size)
    b1 = jnp.zeros((hidden_size,), jnp.float32)          # self.fc1_bias
    w2 = kaiming(k3, hidden_size, hidden_size)
    b2 = jnp.zeros((hidden_size,), jnp.float32)
    w3 = kaiming(k4, hidden_size, output_size)
    b3 = jnp.zeros((output_size,), jnp.float32)
    return (w1n, w1s, b1, w2, b2, w3, b3)


def prepare_params(params):
    """One-time conversion of f32 (in,out) params into the kernel layout.

    Call this ONCE (after init / after each optimizer step), outside the hot
    forward path, so no per-call cast/reshape XLA kernels are launched:
      * matmul weights -> bf16 (MXU peak is for bf16 inputs),
      * biases -> (1, features) f32 rows,
      * output_size == 1 head weight -> a (1, hidden) f32 row for the
        reduce-based projection.
    """
    w1n, w1s, b1, w2, b2, w3, b3 = params
    H = w1n.shape[1]
    O = w3.shape[1]
    bf16, f32 = jnp.bfloat16, jnp.float32
    w3p = w3.T.astype(f32) if O == 1 else w3.astype(bf16)
    return (w1n.astype(bf16), w1s.astype(bf16), b1.reshape(1, H).astype(f32),
            w2.astype(bf16), b2.reshape(1, H).astype(f32),
            w3p, b3.reshape(1, O).astype(f32))


def mine1_reference(noise, sample, params):
    """Pure-JAX f32 reference of the PyTorch forward."""
    w1n, w1s, b1, w2, b2, w3, b3 = params
    x = _leaky_relu(noise @ w1n + sample @ w1s + b1)
    x = _leaky_relu(x @ w2 + b2)
    x = _leaky_relu(x @ w3 + b3)
    return x


if __name__ == "__main__":
    # Module defaults: noise_size=49, sample_size=28*28, hidden=128, output=1.
    B, NOISE, SAMPLE, HIDDEN, OUT = 256, 49, 28 * 28, 128, 1

    key = jax.random.PRNGKey(0)
    k_params, k_noise, k_sample = jax.random.split(key, 3)

    params = init_params(k_params, NOISE, SAMPLE, HIDDEN, OUT)
    prepared = prepare_params(params)          # one-time cast, outside hot path
    prepared = jax.block_until_ready(prepared)

    noise = jax.random.normal(k_noise, (B, NOISE), jnp.float32)
    sample = jax.random.normal(k_sample, (B, SAMPLE), jnp.float32)

    out = mine1_forward(noise, sample, prepared)
    out = jax.block_until_ready(out)

    ref = mine1_reference(noise, sample, params)
    assert out.shape == (B, OUT), out.shape
    # bf16 matmul inputs with f32 accumulation: ~1e-2 relative accuracy.
    assert jnp.allclose(out, ref, atol=5e-2, rtol=5e-2), \
        f"max abs err {jnp.max(jnp.abs(out - ref))}"

    print("KERNEL_OK")
</pallas_src>

<mosaic_0001>
module attributes {stable_mosaic.version = 11 : i64} {
  func.func @mine1_kernel(%arg0: i32, %arg1: memref<256x49xf32, #tpu.memory_space<vmem>>, %arg2: memref<256x784xf32, #tpu.memory_space<vmem>>, %arg3: memref<49x128xbf16, #tpu.memory_space<vmem>>, %arg4: memref<784x128xbf16, #tpu.memory_space<vmem>>, %arg5: memref<1x128xf32, #tpu.memory_space<vmem>>, %arg6: memref<128x128xbf16, #tpu.memory_space<vmem>>, %arg7: memref<1x128xf32, #tpu.memory_space<vmem>>, %arg8: memref<1x128xf32, #tpu.memory_space<vmem>>, %arg9: memref<1x1xf32, #tpu.memory_space<vmem>>, %arg10: memref<256x1xf32, #tpu.memory_space<vmem>>) attributes {dimension_semantics = [#tpu.dimension_semantics<parallel>], iteration_bounds = array<i64: 1>, scalar_prefetch = 0 : i64, scratch_operands = 0 : i64, tpu.core_type = #tpu.core_type<tc>, window_params = [{transform_indices = @transform_0, window_bounds = array<i64: 256, 49>}, {transform_indices = @transform_1, window_bounds = array<i64: 256, 784>}, {pipeline_mode = #tpu.pipeline_mode<synchronous>, transform_indices = @transform_2, window_bounds = array<i64: 49, 128>}, {pipeline_mode = #tpu.pipeline_mode<synchronous>, transform_indices = @transform_3, window_bounds = array<i64: 784, 128>}, {pipeline_mode = #tpu.pipeline_mode<synchronous>, transform_indices = @transform_4, window_bounds = array<i64: 1, 128>}, {pipeline_mode = #tpu.pipeline_mode<synchronous>, transform_indices = @transform_5, window_bounds = array<i64: 128, 128>}, {pipeline_mode = #tpu.pipeline_mode<synchronous>, transform_indices = @transform_6, window_bounds = array<i64: 1, 128>}, {pipeline_mode = #tpu.pipeline_mode<synchronous>, transform_indices = @transform_7, window_bounds = array<i64: 1, 128>}, {pipeline_mode = #tpu.pipeline_mode<synchronous>, transform_indices = @transform_8, window_bounds = array<i64: 1, 1>}, {transform_indices = @transform_9, window_bounds = array<i64: 256, 1>}]} {
    %c0 = arith.constant 0 : index
    %c0_0 = arith.constant 0 : index
    %0 = vector.load %arg1[%c0, %c0_0] : memref<256x49xf32, #tpu.memory_space<vmem>>, vector<256x49xf32>
    %1 = arith.truncf %0 : vector<256x49xf32> to vector<256x49xbf16>
    %c0_1 = arith.constant 0 : index
    %c0_2 = arith.constant 0 : index
    %2 = vector.load %arg3[%c0_1, %c0_2] : memref<49x128xbf16, #tpu.memory_space<vmem>>, vector<49x128xbf16>
    %cst = arith.constant dense<0.000000e+00> : vector<256x128xf32>
    %3 = tpu.matmul %1, %2, %cst {dimension_numbers = #tpu.dot_dimension_numbers<[1], [0], [0], [1], [0, 0, 1, 1], [], []>} : vector<256x49xbf16>, vector<49x128xbf16>, vector<256x128xf32> -> vector<256x128xf32>
    %c0_3 = arith.constant 0 : index
    %c0_4 = arith.constant 0 : index
    %4 = vector.load %arg2[%c0_3, %c0_4] : memref<256x784xf32, #tpu.memory_space<vmem>>, vector<256x784xf32>
    %5 = arith.truncf %4 : vector<256x784xf32> to vector<256x784xbf16>
    %c0_5 = arith.constant 0 : index
    %c0_6 = arith.constant 0 : index
    %6 = vector.load %arg4[%c0_5, %c0_6] : memref<784x128xbf16, #tpu.memory_space<vmem>>, vector<784x128xbf16>
    %cst_7 = arith.constant dense<0.000000e+00> : vector<256x128xf32>
    %7 = tpu.matmul %5, %6, %cst_7 {dimension_numbers = #tpu.dot_dimension_numbers<[1], [0], [0], [1], [0, 0, 1, 1], [], []>} : vector<256x784xbf16>, vector<784x128xbf16>, vector<256x128xf32> -> vector<256x128xf32>
    %8 = arith.addf %3, %7 : vector<256x128xf32>
    %c0_8 = arith.constant 0 : index
    %c0_9 = arith.constant 0 : index
    %9 = vector.load %arg5[%c0_8, %c0_9] : memref<1x128xf32, #tpu.memory_space<vmem>>, vector<1x128xf32>
    %10 = vector.broadcast %9 : vector<1x128xf32> to vector<256x128xf32>
    %11 = arith.addf %8, %10 : vector<256x128xf32>
    %cst_10 = arith.constant 2.000000e-01 : f32
    %12 = vector.broadcast %cst_10 : f32 to vector<256x128xf32>
    %13 = arith.mulf %12, %11 : vector<256x128xf32>
    %14 = arith.maximumf %11, %13 : vector<256x128xf32>
    %15 = arith.truncf %14 : vector<256x128xf32> to vector<256x128xbf16>
    %c0_11 = arith.constant 0 : index
    %c0_12 = arith.constant 0 : index
    %16 = vector.load %arg6[%c0_11, %c0_12] : memref<128x128xbf16, #tpu.memory_space<vmem>>, vector<128x128xbf16>
    %cst_13 = arith.constant dense<0.000000e+00> : vector<256x128xf32>
    %17 = tpu.matmul %15, %16, %cst_13 {dimension_numbers = #tpu.dot_dimension_numbers<[1], [0], [0], [1], [0, 0, 1, 1], [], []>} : vector<256x128xbf16>, vector<128x128xbf16>, vector<256x128xf32> -> vector<256x128xf32>
    %c0_14 = arith.constant 0 : index
    %c0_15 = arith.constant 0 : index
    %18 = vector.load %arg7[%c0_14, %c0_15] : memref<1x128xf32, #tpu.memory_space<vmem>>, vector<1x128xf32>
    %19 = vector.broadcast %18 : vector<1x128xf32> to vector<256x128xf32>
    %20 = arith.addf %17, %19 : vector<256x128xf32>
    %cst_16 = arith.constant 2.000000e-01 : f32
    %21 = vector.broadcast %cst_16 : f32 to vector<256x128xf32>
    %22 = arith.mulf %21, %20 : vector<256x128xf32>
    %23 = arith.maximumf %20, %22 : vector<256x128xf32>
    %c0_17 = arith.constant 0 : index
    %c0_18 = arith.constant 0 : index
    %24 = vector.load %arg8[%c0_17, %c0_18] : memref<1x128xf32, #tpu.memory_space<vmem>>, vector<1x128xf32>
    %25 = vector.broadcast %24 : vector<1x128xf32> to vector<256x128xf32>
    %26 = arith.mulf %23, %25 : vector<256x128xf32>
    %cst_19 = arith.constant dense<0.000000e+00> : vector<256xf32>
    %27 = vector.multi_reduction <add>, %26, %cst_19 [1] : vector<256x128xf32> to vector<256xf32>
    %28 = vector.shape_cast %27 : vector<256xf32> to vector<256x1xf32>
    %c0_20 = arith.constant 0 : index
    %c0_21 = arith.constant 0 : index
    %29 = vector.load %arg9[%c0_20, %c0_21] : memref<1x1xf32, #tpu.memory_space<vmem>>, vector<1x1xf32>
    %30 = vector.broadcast %29 : vector<1x1xf32> to vector<256x1xf32>
    %31 = arith.addf %28, %30 : vector<256x1xf32>
    %cst_22 = arith.constant 2.000000e-01 : f32
    %32 = vector.broadcast %cst_22 : f32 to vector<256x1xf32>
    %33 = arith.mulf %32, %31 : vector<256x1xf32>
    %34 = arith.maximumf %31, %33 : vector<256x1xf32>
    %c0_23 = arith.constant 0 : index
    %c0_24 = arith.constant 0 : index
    %35 = vector.load %arg10[%c0_23, %c0_24] : memref<256x1xf32, #tpu.memory_space<vmem>>, vector<256x1xf32>
    tpu.vector_store %arg10[%c0_23, %c0_24], %34 {strides = array<i32>} : memref<256x1xf32, #tpu.memory_space<vmem>>, vector<256x1xf32>,
    return
  }
  func.func @transform_0(%arg0: i32) -> (i32, i32) {
    %c0_i32 = arith.constant 0 : i32
    %c0_i32_0 = arith.constant 0 : i32
    return %arg0, %c0_i32 : i32, i32
  }
  func.func @transform_1(%arg0: i32) -> (i32, i32) {
    %c0_i32 = arith.constant 0 : i32
    %c0_i32_0 = arith.constant 0 : i32
    return %arg0, %c0_i32 : i32, i32
  }
  func.func @transform_2(%arg0: i32) -> (i32, i32) {
    %c0_i32 = arith.constant 0 : i32
    %c0_i32_0 = arith.constant 0 : i32
    %c0_i32_1 = arith.constant 0 : i32
    return %c0_i32, %c0_i32_0 : i32, i32
  }
  func.func @transform_3(%arg0: i32) -> (i32, i32) {
    %c0_i32 = arith.constant 0 : i32
    %c0_i32_0 = arith.constant 0 : i32
    %c0_i32_1 = arith.constant 0 : i32
    return %c0_i32, %c0_i32_0 : i32, i32
  }
  func.func @transform_4(%arg0: i32) -> (i32, i32) {
    %c0_i32 = arith.constant 0 : i32
    %c0_i32_0 = arith.constant 0 : i32
    %c0_i32_1 = arith.constant 0 : i32
    return %c0_i32, %c0_i32_0 : i32, i32
  }
  func.func @transform_5(%arg0: i32) -> (i32, i32) {
    %c0_i32 = arith.constant 0 : i32
    %c0_i32_0 = arith.constant 0 : i32
    %c0_i32_1 = arith.constant 0 : i32
    return %c0_i32, %c0_i32_0 : i32, i32
  }
  func.func @transform_6(%arg0: i32) -> (i32, i32) {
    %c0_i32 = arith.constant 0 : i32
    %c0_i32_0 = arith.constant 0 : i32
    %c0_i32_1 = arith.constant 0 : i32
    return %c0_i32, %c0_i32_0 : i32, i32
  }
  func.func @transform_7(%arg0: i32) -> (i32, i32) {
    %c0_i32 = arith.constant 0 : i32
    %c0_i32_0 = arith.constant 0 : i32
    %c0_i32_1 = arith.constant 0 : i32
    return %c0_i32, %c0_i32_0 : i32, i32
  }
  func.func @transform_8(%arg0: i32) -> (i32, i32) {
    %c0_i32 = arith.constant 0 : i32
    %c0_i32_0 = arith.constant 0 : i32
    %c0_i32_1 = arith.constant 0 : i32
    return %c0_i32, %c0_i32_0 : i32, i32
  }
  func.func @transform_9(%arg0: i32) -> (i32, i32) {
    %c0_i32 = arith.constant 0 : i32
    %c0_i32_0 = arith.constant 0 : i32
    return %arg0, %c0_i32 : i32, i32
  }
}

</mosaic_0001>

<llo_original>
// kernel: mine1_forward.1
$region0: #{mine1_forward.1}
  #allocation0 [shape = 'u32[]', space=smem, size = 0x4, offset = 0x4, fixed_abs, tag = 'smem constant byte address 0x4 - core index']
  #allocation1 [shape = 'u32[72,128]{1,0:T(1,128)}', space=vmem, size = 0x9000, scoped, tag = 'internal scratch']
  #allocation2 [shape = 'f32[1,1]{1,0:T(1,128)S(1)}', space=vmem, size = 0x200, scoped, tag = 'scoped memory for mine1_forward.1']
  %s0 = inlined_call_operand.vmem [shape: f32[256,49], index: 0, kind: input, shape index: {}]
  %s1 = inlined_call_operand.vmem [shape: f32[256,784], index: 1, kind: input, shape index: {}]
  %s2 = inlined_call_operand.vmem [shape: bf16[49,128], index: 2, kind: input, shape index: {}]
  %s3 = inlined_call_operand.vmem [shape: bf16[784,128], index: 3, kind: input, shape index: {}]
  %s4 = inlined_call_operand.vmem [shape: f32[1,128], index: 4, kind: input, shape index: {}]
  %s5 = inlined_call_operand.vmem [shape: bf16[128,128], index: 5, kind: input, shape index: {}]
  %s6 = inlined_call_operand.vmem [shape: f32[1,128], index: 6, kind: input, shape index: {}]
  %s7 = inlined_call_operand.vmem [shape: f32[1,128], index: 7, kind: input, shape index: {}]
  %s8 = inlined_call_operand.<no memory space> [shape: f32[1,1], index: 8, kind: input, shape index: {}]
  %s9 = inlined_call_operand.vmem [shape: f32[256,1], index: 9, kind: output, shape index: {}]
  %s10 = sld [smem:[#allocation0]]
  $region46: #{mine1_forward.1} parent=0
    _
  %s12 = ssub.s32 1, %s10
  %s13 = scalar_select 0, %s12, %s10
  %v14 = vstv %s8
  %15 = vst [vmem:[#allocation2] sm:$0x1] %v14
  // Predicated region
  $region2: #{mine1_forward.1} parent=0 // pred_check
    _
  $region3: #{mine1_forward.1} parent=0 // pred_check_branch
    %17 = sbr.rel (0) target = $region5
  $region4: #{mine1_forward.1} parent=0 // pred_region
    _
  $region5: #{mine1_forward.1} parent=0 // pred_fallthru
    _
  // Predicated region
  $region6: #{mine1_forward.1} parent=0 // pred_check
    _
  $region7: #{mine1_forward.1} parent=0 // pred_check_branch
    %19 = sbr.rel (0) target = $region9
  $region8: #{mine1_forward.1} parent=0 // pred_region
    _
  $region9: #{mine1_forward.1} parent=0 // pred_fallthru
    _
  // Predicated region
  $region10: #{mine1_forward.1} parent=0 // pred_check
    _
  $region11: #{mine1_forward.1} parent=0 // pred_check_branch
    %21 = sbr.rel (0) target = $region13
  $region12: #{mine1_forward.1} parent=0 // pred_region
    _
  $region13: #{mine1_forward.1} parent=0 // pred_fallthru
    _
  // Predicated region
  $region14: #{mine1_forward.1} parent=0 // pred_check
    _
  $region15: #{mine1_forward.1} parent=0 // pred_check_branch
    %23 = sbr.rel (0) target = $region17
  $region16: #{mine1_forward.1} parent=0 // pred_region
    _
  $region17: #{mine1_forward.1} parent=0 // pred_fallthru
    _
  // Predicated region
  $region18: #{mine1_forward.1} parent=0 // pred_check
    _
  $region19: #{mine1_forward.1} parent=0 // pred_check_branch
    %25 = sbr.rel (0) target = $region21
  $region20: #{mine1_forward.1} parent=0 // pred_region
    _
  $region21: #{mine1_forward.1} parent=0 // pred_fallthru
    _
  // Predicated region
  $region22: #{mine1_forward.1} parent=0 // pred_check
    _
  $region23: #{mine1_forward.1} parent=0 // pred_check_branch
    %27 = sbr.rel (0) target = $region25
  $region24: #{mine1_forward.1} parent=0 // pred_region
    _
  $region25: #{mine1_forward.1} parent=0 // pred_fallthru
    _
  // Predicated region
  $region26: #{mine1_forward.1} parent=0 // pred_check
    _
  $region27: #{mine1_forward.1} parent=0 // pred_check_branch
    %29 = sbr.rel (0) target = $region29
  $region28: #{mine1_forward.1} parent=0 // pred_region
    _
  $region29: #{mine1_forward.1} parent=0 // pred_fallthru
    _
  // Predicated region
  $region30: #{mine1_forward.1} parent=0 // pred_check
    _
  $region31: #{mine1_forward.1} parent=0 // pred_check_branch
    %31 = sbr.rel (0) target = $region33
  $region32: #{mine1_forward.1} parent=0 // pred_region
    _
  $region33: #{mine1_forward.1} parent=0 // pred_fallthru
    _
  // Predicated region
  $region34: #{mine1_forward.1} parent=0 // pred_check
    _
  $region35: #{mine1_forward.1} parent=0 // pred_check_branch
    %33 = sbr.rel (0) target = $region37
  $region36: #{mine1_forward.1} parent=0 // pred_region
    _
  $region37: #{mine1_forward.1} parent=0 // pred_fallthru
    _
  %v35 = vld [vmem:[%s0] sm:$0xff]
  %v36 = vld [vmem:[%s0 + $0x8] sm:$0xff]
  %v37 = vld [vmem:[%s0 + $0x10] sm:$0xff]
  %v38 = vld [vmem:[%s0 + $0x18] sm:$0xff]
  %v39 = vld [vmem:[%s0 + $0x20] sm:$0xff]
  %v40 = vld [vmem:[%s0 + $0x28] sm:$0xff]
  %v41 = vld [vmem:[%s0 + $0x30] sm:$0xff]
  %v42 = vld [vmem:[%s0 + $0x38] sm:$0xff]
  %v43 = vld [vmem:[%s0 + $0x40] sm:$0xff]
  %v44 = vld [vmem:[%s0 + $0x48] sm:$0xff]
  %v45 = vld [vmem:[%s0 + $0x50] sm:$0xff]
  %v46 = vld [vmem:[%s0 + $0x58] sm:$0xff]
  %v47 = vld [vmem:[%s0 + $0x60] sm:$0xff]
  %v48 = vld [vmem:[%s0 + $0x68] sm:$0xff]
  %v49 = vld [vmem:[%s0 + $0x70] sm:$0xff]
  %v50 = vld [vmem:[%s0 + $0x78] sm:$0xff]
  %v51 = vld [vmem:[%s0 + $0x80] sm:$0xff]
  %v52 = vld [vmem:[%s0 + $0x88] sm:$0xff]
  %v53 = vld [vmem:[%s0 + $0x90] sm:$0xff]
  %v54 = vld [vmem:[%s0 + $0x98] sm:$0xff]
  %v55 = vld [vmem:[%s0 + $0xa0] sm:$0xff]
  %v56 = vld [vmem:[%s0 + $0xa8] sm:$0xff]
  %v57 = vld [vmem:[%s0 + $0xb0] sm:$0xff]
  %v58 = vld [vmem:[%s0 + $0xb8] sm:$0xff]
  %v59 = vld [vmem:[%s0 + $0xc0] sm:$0xff]
  %v60 = vld [vmem:[%s0 + $0xc8] sm:$0xff]
  %v61 = vld [vmem:[%s0 + $0xd0] sm:$0xff]
  %v62 = vld [vmem:[%s0 + $0xd8] sm:$0xff]
  %v63 = vld [vmem:[%s0 + $0xe0] sm:$0xff]
  %v64 = vld [vmem:[%s0 + $0xe8] sm:$0xff]
  %v65 = vld [vmem:[%s0 + $0xf0] sm:$0xff]
  %v66 = vld [vmem:[%s0 + $0xf8] sm:$0xff]
  %v67 = vpack.c.bf16 %v36, %v35
  %v68 = vpack.c.bf16 %v38, %v37
  %v69 = vpack.c.bf16 %v40, %v39
  %v70 = vpack.c.bf16 %v42, %v41
  %v71 = vpack.c.bf16 %v44, %v43
  %v72 = vpack.c.bf16 %v46, %v45
  %v73 = vpack.c.bf16 %v48, %v47
  %v74 = vpack.c.bf16 %v50, %v49
  %v75 = vpack.c.bf16 %v52, %v51
  %v76 = vpack.c.bf16 %v54, %v53
  %v77 = vpack.c.bf16 %v56, %v55
  %v78 = vpack.c.bf16 %v58, %v57
  %v79 = vpack.c.bf16 %v60, %v59
  %v80 = vpack.c.bf16 %v62, %v61
  %v81 = vpack.c.bf16 %v64, %v63
  %v82 = vpack.c.bf16 %v66, %v65
  %v83 = vld [vmem:[%s2] sm:$0xf]
  %v84 = vld [vmem:[%s2 + $0x4] sm:$0xf]
  %v85 = vld [vmem:[%s2 + $0x8] sm:$0xf]
  %v86 = vld [vmem:[%s2 + $0xc] sm:$0xf]
  %v87 = vld [vmem:[%s2 + $0x10] sm:$0xf]
  %v88 = vld [vmem:[%s2 + $0x14] sm:$0xf]
  %v89 = vld [vmem:[%s2 + $0x18] sm:$0x1]
  %v90 = vld [vmem:[%s1] sm:$0xff]
  %v91 = vld [vmem:[%s1 + $0x8] sm:$0xff]
  %v92 = vld [vmem:[%s1 + $0x10] sm:$0xff]
  %v93 = vld [vmem:[%s1 + $0x18] sm:$0xff]
  %v94 = vld [vmem:[%s1 + $0x20] sm:$0xff]
  %v95 = vld [vmem:[%s1 + $0x28] sm:$0xff]
  %v96 = vld [vmem:[%s1 + $0x30] sm:$0xff]
  %v97 = vld [vmem:[%s1 + $0x38] sm:$0xff]
  %v98 = vld [vmem:[%s1 + $0x40] sm:$0xff]
  %v99 = vld [vmem:[%s1 + $0x48] sm:$0xff]
  %v100 = vld [vmem:[%s1 + $0x50] sm:$0xff]
  %v101 = vld [vmem:[%s1 + $0x58] sm:$0xff]
  %v102 = vld [vmem:[%s1 + $0x60] sm:$0xff]
  %v103 = vld [vmem:[%s1 + $0x68] sm:$0xff]
  %v104 = vld [vmem:[%s1 + $0x70] sm:$0xff]
  %v105 = vld [vmem:[%s1 + $0x78] sm:$0xff]
  %v106 = vld [vmem:[%s1 + $0x80] sm:$0xff]
  %v107 = vld [vmem:[%s1 + $0x88] sm:$0xff]
  %v108 = vld [vmem:[%s1 + $0x90] sm:$0xff]
  %v109 = vld [vmem:[%s1 + $0x98] sm:$0xff]
  %v110 = vld [vmem:[%s1 + $0xa0] sm:$0xff]
  %v111 = vld [vmem:[%s1 + $0xa8] sm:$0xff]
  %v112 = vld [vmem:[%s1 + $0xb0] sm:$0xff]
  %v113 = vld [vmem:[%s1 + $0xb8] sm:$0xff]
  %v114 = vld [vmem:[%s1 + $0xc0] sm:$0xff]
  %v115 = vld [vmem:[%s1 + $0xc8] sm:$0xff]
  %v116 = vld [vmem:[%s1 + $0xd0] sm:$0xff]
  %v117 = vld [vmem:[%s1 + $0xd8] sm:$0xff]
  %v118 = vld [vmem:[%s1 + $0xe0] sm:$0xff]
  %v119 = vld [vmem:[%s1 + $0xe8] sm:$0xff]
  %v120 = vld [vmem:[%s1 + $0xf0] sm:$0xff]
  %v121 = vld [vmem:[%s1 + $0xf8] sm:$0xff]
  %v122 = vld [vmem:[%s1 + $0x100] sm:$0xff]
  %v123 = vld [vmem:[%s1 + $0x108] sm:$0xff]
  %v124 = vld [vmem:[%s1 + $0x110] sm:$0xff]
  %v125 = vld [vmem:[%s1 + $0x118] sm:$0xff]
  %v126 = vld [vmem:[%s1 + $0x120] sm:$0xff]
  %v127 = vld [vmem:[%s1 + $0x128] sm:$0xff]
  %v128 = vld [vmem:[%s1 + $0x130] sm:$0xff]
  %v129 = vld [vmem:[%s1 + $0x138] sm:$0xff]
  %v130 = vld [vmem:[%s1 + $0x140] sm:$0xff]
  %v131 = vld [vmem:[%s1 + $0x148] sm:$0xff]
  %v132 = vld [vmem:[%s1 + $0x150] sm:$0xff]
  %v133 = vld [vmem:[%s1 + $0x158] sm:$0xff]
  %v134 = vld [vmem:[%s1 + $0x160] sm:$0xff]
  %v135 = vld [vmem:[%s1 + $0x168] sm:$0xff]
  %v136 = vld [vmem:[%s1 + $0x170] sm:$0xff]
  %v137 = vld [vmem:[%s1 + $0x178] sm:$0xff]
  %v138 = vld [vmem:[%s1 + $0x180] sm:$0xff]
  %v139 = vld [vmem:[%s1 + $0x188] sm:$0xff]
  %v140 = vld [vmem:[%s1 + $0x190] sm:$0xff]
  %v141 = vld [vmem:[%s1 + $0x198] sm:$0xff]
  %v142 = vld [vmem:[%s1 + $0x1a0] sm:$0xff]
  %v143 = vld [vmem:[%s1 + $0x1a8] sm:$0xff]
  %v144 = vld [vmem:[%s1 + $0x1b0] sm:$0xff]
  %v145 = vld [vmem:[%s1 + $0x1b8] sm:$0xff]
  %v146 = vld [vmem:[%s1 + $0x1c0] sm:$0xff]
  %v147 = vld [vmem:[%s1 + $0x1c8] sm:$0xff]
  %v148 = vld [vmem:[%s1 + $0x1d0] sm:$0xff]
  %v149 = vld [vmem:[%s1 + $0x1d8] sm:$0xff]
  %v150 = vld [vmem:[%s1 + $0x1e0] sm:$0xff]
  %v151 = vld [vmem:[%s1 + $0x1e8] sm:$0xff]
  %v152 = vld [vmem:[%s1 + $0x1f0] sm:$0xff]
  %v153 = vld [vmem:[%s1 + $0x1f8] sm:$0xff]
  %v154 = vld [vmem:[%s1 + $0x200] sm:$0xff]
  %v155 = vld [vmem:[%s1 + $0x208] sm:$0xff]
  %v156 = vld [vmem:[%s1 + $0x210] sm:$0xff]
  %v157 = vld [vmem:[%s1 + $0x218] sm:$0xff]
  %v158 = vld [vmem:[%s1 + $0x220] sm:$0xff]
  %v159 = vld [vmem:[%s1 + $0x228] sm:$0xff]
  %v160 = vld [vmem:[%s1 + $0x230] sm:$0xff]
  %v161 = vld [vmem:[%s1 + $0x238] sm:$0xff]
  %v162 = vld [vmem:[%s1 + $0x240] sm:$0xff]
  %v163 = vld [vmem:[%s1 + $0x248] sm:$0xff]
  %v164 = vld [vmem:[%s1 + $0x250] sm:$0xff]
  %v165 = vld [vmem:[%s1 + $0x258] sm:$0xff]
  %v166 = vld [vmem:[%s1 + $0x260] sm:$0xff]
  %v167 = vld [vmem:[%s1 + $0x268] sm:$0xff]
  %v168 = vld [vmem:[%s1 + $0x270] sm:$0xff]
  %v169 = vld [vmem:[%s1 + $0x278] sm:$0xff]
  %v170 = vld [vmem:[%s1 + $0x280] sm:$0xff]
  %v171 = vld [vmem:[%s1 + $0x288] sm:$0xff]
  %v172 = vld [vmem:[%s1 + $0x290] sm:$0xff]
  %v173 = vld [vmem:[%s1 + $0x298] sm:$0xff]
  %v174 = vld [vmem:[%s1 + $0x2a0] sm:$0xff]
  %v175 = vld [vmem:[%s1 + $0x2a8] sm:$0xff]
  %v176 = vld [vmem:[%s1 + $0x2b0] sm:$0xff]
  %v177 = vld [vmem:[%s1 + $0x2b8] sm:$0xff]
  %v178 = vld [vmem:[%s1 + $0x2c0] sm:$0xff]
  %v179 = vld [vmem:[%s1 + $0x2c8] sm:$0xff]
  %v180 = vld [vmem:[%s1 + $0x2d0] sm:$0xff]
  %v181 = vld [vmem:[%s1 + $0x2d8] sm:$0xff]
  %v182 = vld [vmem:[%s1 + $0x2e0] sm:$0xff]
  %v183 = vld [vmem:[%s1 + $0x2e8] sm:$0xff]
  %v184 = vld [vmem:[%s1 + $0x2f0] sm:$0xff]
  %v185 = vld [vmem:[%s1 + $0x2f8] sm:$0xff]
  %v186 = vld [vmem:[%s1 + $0x300] sm:$0xff]
  %v187 = vld [vmem:[%s1 + $0x308] sm:$0xff]
  %v188 = vld [vmem:[%s1 + $0x310] sm:$0xff]
  %v189 = vld [vmem:[%s1 + $0x318] sm:$0xff]
  %v190 = vld [vmem:[%s1 + $0x320] sm:$0xff]
  %v191 = vld [vmem:[%s1 + $0x328] sm:$0xff]
  %v192 = vld [vmem:[%s1 + $0x330] sm:$0xff]
  %v193 = vld [vmem:[%s1 + $0x338] sm:$0xff]
  %v194 = vld [vmem:[%s1 + $0x340] sm:$0xff]
  %v195 = vld [vmem:[%s1 + $0x348] sm:$0xff]
  %v196 = vld [vmem:[%s1 + $0x350] sm:$0xff]
  %v197 = vld [vmem:[%s1 + $0x358] sm:$0xff]
  %v198 = vld [vmem:[%s1 + $0x360] sm:$0xff]
  %v199 = vld [vmem:[%s1 + $0x368] sm:$0xff]
  %v200 = vld [vmem:[%s1 + $0x370] sm:$0xff]
  %v201 = vld [vmem:[%s1 + $0x378] sm:$0xff]
  %v202 = vld [vmem:[%s1 + $0x380] sm:$0xff]
  %v203 = vld [vmem:[%s1 + $0x388] sm:$0xff]
  %v204 = vld [vmem:[%s1 + $0x390] sm:$0xff]
  %v205 = vld [vmem:[%s1 + $0x398] sm:$0xff]
  %v206 = vld [vmem:[%s1 + $0x3a0] sm:$0xff]
  %v207 = vld [vmem:[%s1 + $0x3a8] sm:$0xff]
  %v208 = vld [vmem:[%s1 + $0x3b0] sm:$0xff]
  %v209 = vld [vmem:[%s1 + $0x3b8] sm:$0xff]
  %v210 = vld [vmem:[%s1 + $0x3c0] sm:$0xff]
  %v211 = vld [vmem:[%s1 + $0x3c8] sm:$0xff]
  %v212 = vld [vmem:[%s1 + $0x3d0] sm:$0xff]
  %v213 = vld [vmem:[%s1 + $0x3d8] sm:$0xff]
  %v214 = vld [vmem:[%s1 + $0x3e0] sm:$0xff]
  %v215 = vld [vmem:[%s1 + $0x3e8] sm:$0xff]
  %v216 = vld [vmem:[%s1 + $0x3f0] sm:$0xff]
  %v217 = vld [vmem:[%s1 + $0x3f8] sm:$0xff]
  %v218 = vld [vmem:[%s1 + $0x400] sm:$0xff]
  %v219 = vld [vmem:[%s1 + $0x408] sm:$0xff]
  %v220 = vld [vmem:[%s1 + $0x410] sm:$0xff]
  %v221 = vld [vmem:[%s1 + $0x418] sm:$0xff]
  %v222 = vld [vmem:[%s1 + $0x420] sm:$0xff]
  %v223 = vld [vmem:[%s1 + $0x428] sm:$0xff]
  %v224 = vld [vmem:[%s1 + $0x430] sm:$0xff]
  %v225 = vld [vmem:[%s1 + $0x438] sm:$0xff]
  %v226 = vld [vmem:[%s1 + $0x440] sm:$0xff]
  %v227 = vld [vmem:[%s1 + $0x448] sm:$0xff]
  %v228 = vld [vmem:[%s1 + $0x450] sm:$0xff]
  %v229 = vld [vmem:[%s1 + $0x458] sm:$0xff]
  %v230 = vld [vmem:[%s1 + $0x460] sm:$0xff]
  %v231 = vld [vmem:[%s1 + $0x468] sm:$0xff]
  %v232 = vld [vmem:[%s1 + $0x470] sm:$0xff]
  %v233 = vld [vmem:[%s1 + $0x478] sm:$0xff]
  %v234 = vld [vmem:[%s1 + $0x480] sm:$0xff]
  %v235 = vld [vmem:[%s1 + $0x488] sm:$0xff]
  %v236 = vld [vmem:[%s1 + $0x490] sm:$0xff]
  %v237 = vld [vmem:[%s1 + $0x498] sm:$0xff]
  %v238 = vld [vmem:[%s1 + $0x4a0] sm:$0xff]
  %v239 = vld [vmem:[%s1 + $0x4a8] sm:$0xff]
  %v240 = vld [vmem:[%s1 + $0x4b0] sm:$0xff]
  %v241 = vld [vmem:[%s1 + $0x4b8] sm:$0xff]
  %v242 = vld [vmem:[%s1 + $0x4c0] sm:$0xff]
  %v243 = vld [vmem:[%s1 + $0x4c8] sm:$0xff]
  %v244 = vld [vmem:[%s1 + $0x4d0] sm:$0xff]
  %v245 = vld [vmem:[%s1 + $0x4d8] sm:$0xff]
  %v246 = vld [vmem:[%s1 + $0x4e0] sm:$0xff]
  %v247 = vld [vmem:[%s1 + $0x4e8] sm:$0xff]
  %v248 = vld [vmem:[%s1 + $0x4f0] sm:$0xff]
  %v249 = vld [vmem:[%s1 + $0x4f8] sm:$0xff]
  %v250 = vld [vmem:[%s1 + $0x500] sm:$0xff]
  %v251 = vld [vmem:[%s1 + $0x508] sm:$0xff]
  %v252 = vld [vmem:[%s1 + $0x510] sm:$0xff]
  %v253 = vld [vmem:[%s1 + $0x518] sm:$0xff]
  %v254 = vld [vmem:[%s1 + $0x520] sm:$0xff]
  %v255 = vld [vmem:[%s1 + $0x528] sm:$0xff]
  %v256 = vld [vmem:[%s1 + $0x530] sm:$0xff]
  %v257 = vld [vmem:[%s1 + $0x538] sm:$0xff]
  %v258 = vld [vmem:[%s1 + $0x540] sm:$0xff]
  %v259 = vld [vmem:[%s1 + $0x548] sm:$0xff]
  %v260 = vld [vmem:[%s1 + $0x550] sm:$0xff]
  %v261 = vld [vmem:[%s1 + $0x558] sm:$0xff]
  %v262 = vld [vmem:[%s1 + $0x560] sm:$0xff]
  %v263 = vld [vmem:[%s1 + $0x568] sm:$0xff]
  %v264 = vld [vmem:[%s1 + $0x570] sm:$0xff]
  %v265 = vld [vmem:[%s1 + $0x578] sm:$0xff]
  %v266 = vld [vmem:[%s1 + $0x580] sm:$0xff]
  %v267 = vld [vmem:[%s1 + $0x588] sm:$0xff]
  %v268 = vld [vmem:[%s1 + $0x590] sm:$0xff]
  %v269 = vld [vmem:[%s1 + $0x598] sm:$0xff]
  %v270 = vld [vmem:[%s1 + $0x5a0] sm:$0xff]
  %v271 = vld [vmem:[%s1 + $0x5a8] sm:$0xff]
  %v272 = vld [vmem:[%s1 + $0x5b0] sm:$0xff]
  %v273 = vld [vmem:[%s1 + $0x5b8] sm:$0xff]
  %v274 = vld [vmem:[%s1 + $0x5c0] sm:$0xff]
  %v275 = vld [vmem:[%s1 + $0x5c8] sm:$0xff]
  %v276 = vld [vmem:[%s1 + $0x5d0] sm:$0xff]
  %v277 = vld [vmem:[%s1 + $0x5d8] sm:$0xff]
  %v278 = vld [vmem:[%s1 + $0x5e0] sm:$0xff]
  %v279 = vld [vmem:[%s1 + $0x5e8] sm:$0xff]
  %v280 = vld [vmem:[%s1 + $0x5f0] sm:$0xff]
  %v281 = vld [vmem:[%s1 + $0x5f8] sm:$0xff]
  %v282 = vld [vmem:[%s1 + $0x600] sm:$0xff]
  %v283 = vld [vmem:[%s1 + $0x608] sm:$0xff]
  %v284 = vld [vmem:[%s1 + $0x610] sm:$0xff]
  %v285 = vld [vmem:[%s1 + $0x618] sm:$0xff]
  %v286 = vld [vmem:[%s1 + $0x620] sm:$0xff]
  %v287 = vld [vmem:[%s1 + $0x628] sm:$0xff]
  %v288 = vld [vmem:[%s1 + $0x630] sm:$0xff]
  %v289 = vld [vmem:[%s1 + $0x638] sm:$0xff]
  %v290 = vld [vmem:[%s1 + $0x640] sm:$0xff]
  %v291 = vld [vmem:[%s1 + $0x648] sm:$0xff]
  %v292 = vld [vmem:[%s1 + $0x650] sm:$0xff]
  %v293 = vld [vmem:[%s1 + $0x658] sm:$0xff]
  %v294 = vld [vmem:[%s1 + $0x660] sm:$0xff]
  %v295 = vld [vmem:[%s1 + $0x668] sm:$0xff]
  %v296 = vld [vmem:[%s1 + $0x670] sm:$0xff]
  %v297 = vld [vmem:[%s1 + $0x678] sm:$0xff]
  %v298 = vld [vmem:[%s1 + $0x680] sm:$0xff]
  %v299 = vld [vmem:[%s1 + $0x688] sm:$0xff]
  %v300 = vld [vmem:[%s1 + $0x690] sm:$0xff]
  %v301 = vld [vmem:[%s1 + $0x698] sm:$0xff]
  %v302 = vld [vmem:[%s1 + $0x6a0] sm:$0xff]
  %v303 = vld [vmem:[%s1 + $0x6a8] sm:$0xff]
  %v304 = vld [vmem:[%s1 + $0x6b0] sm:$0xff]
  %v305 = vld [vmem:[%s1 + $0x6b8] sm:$0xff]
  %v306 = vld [vmem:[%s1 + $0x6c0] sm:$0xff]
  %v307 = vld [vmem:[%s1 + $0x6c8] sm:$0xff]
  %v308 = vld [vmem:[%s1 + $0x6d0] sm:$0xff]
  %v309 = vld [vmem:[%s1 + $0x6d8] sm:$0xff]
  %v310 = vld [vmem:[%s1 + $0x6e0] sm:$0xff]
  %v311 = vld [vmem:[%s1 + $0x6e8] sm:$0xff]
  %v312 = vld [vmem:[%s1 + $0x6f0] sm:$0xff]
  %v313 = vld [vmem:[%s1 + $0x6f8] sm:$0xff]
  %v314 = vpack.c.bf16 %v97, %v90
  %v315 = vpack.c.bf16 %v98, %v91
  %v316 = vpack.c.bf16 %v99, %v92
  %v317 = vpack.c.bf16 %v100, %v93
  %v318 = vpack.c.bf16 %v101, %v94
  %v319 = vpack.c.bf16 %v102, %v95
  %v320 = vpack.c.bf16 %v103, %v96
  %v321 = vpack.c.bf16 %v111, %v104
  %v322 = vpack.c.bf16 %v112, %v105
  %v323 = vpack.c.bf16 %v113, %v106
  %v324 = vpack.c.bf16 %v114, %v107
  %v325 = vpack.c.bf16 %v115, %v108
  %v326 = vpack.c.bf16 %v116, %v109
  %v327 = vpack.c.bf16 %v117, %v110
  %v328 = vpack.c.bf16 %v125, %v118
  %v329 = vpack.c.bf16 %v126, %v119
  %v330 = vpack.c.bf16 %v127, %v120
  %v331 = vpack.c.bf16 %v128, %v121
  %v332 = vpack.c.bf16 %v129, %v122
  %v333 = vpack.c.bf16 %v130, %v123
  %v334 = vpack.c.bf16 %v131, %v124
  %v335 = vpack.c.bf16 %v139, %v132
  %v336 = vpack.c.bf16 %v140, %v133
  %v337 = vpack.c.bf16 %v141, %v134
  %v338 = vpack.c.bf16 %v142, %v135
  %v339 = vpack.c.bf16 %v143, %v136
  %v340 = vpack.c.bf16 %v144, %v137
  %v341 = vpack.c.bf16 %v145, %v138
  %v342 = vpack.c.bf16 %v153, %v146
  %v343 = vpack.c.bf16 %v154, %v147
  %v344 = vpack.c.bf16 %v155, %v148
  %v345 = vpack.c.bf16 %v156, %v149
  %v346 = vpack.c.bf16 %v157, %v150
  %v347 = vpack.c.bf16 %v158, %v151
  %v348 = vpack.c.bf16 %v159, %v152
  %v349 = vpack.c.bf16 %v167, %v160
  %v350 = vpack.c.bf16 %v168, %v161
  %v351 = vpack.c.bf16 %v169, %v162
  %v352 = vpack.c.bf16 %v170, %v163
  %v353 = vpack.c.bf16 %v171, %v164
  %v354 = vpack.c.bf16 %v172, %v165
  %v355 = vpack.c.bf16 %v173, %v166
  %v356 = vpack.c.bf16 %v181, %v174
  %v357 = vpack.c.bf16 %v182, %v175
  %v358 = vpack.c.bf16 %v183, %v176
  %v359 = vpack.c.bf16 %v184, %v177
  %v360 = vpack.c.bf16 %v185, %v178
  %v361 = vpack.c.bf16 %v186, %v179
  %v362 = vpack.c.bf16 %v187, %v180
  %v363 = vpack.c.bf16 %v195, %v188
  %v364 = vpack.c.bf16 %v196, %v189
  %v365 = vpack.c.bf16 %v197, %v190
  %v366 = vpack.c.bf16 %v198, %v191
  %v367 = vpack.c.bf16 %v199, %v192
  %v368 = vpack.c.bf16 %v200, %v193
  %v369 = vpack.c.bf16 %v201, %v194
  %v370 = vpack.c.bf16 %v209, %v202
  %v371 = vpack.c.bf16 %v210, %v203
  %v372 = vpack.c.bf16 %v211, %v204
  %v373 = vpack.c.bf16 %v212, %v205
  %v374 = vpack.c.bf16 %v213, %v206
  %v375 = vpack.c.bf16 %v214, %v207
  %v376 = vpack.c.bf16 %v215, %v208
  %v377 = vpack.c.bf16 %v223, %v216
  %v378 = vpack.c.bf16 %v224, %v217
  %v379 = vpack.c.bf16 %v225, %v218
  %v380 = vpack.c.bf16 %v226, %v219
  %v381 = vpack.c.bf16 %v227, %v220
  %v382 = vpack.c.bf16 %v228, %v221
  %v383 = vpack.c.bf16 %v229, %v222
  %v384 = vpack.c.bf16 %v237, %v230
  %v385 = vpack.c.bf16 %v238, %v231
  %v386 = vpack.c.bf16 %v239, %v232
  %v387 = vpack.c.bf16 %v240, %v233
  %v388 = vpack.c.bf16 %v241, %v234
  %v389 = vpack.c.bf16 %v242, %v235
  %v390 = vpack.c.bf16 %v243, %v236
  %v391 = vpack.c.bf16 %v251, %v244
  %v392 = vpack.c.bf16 %v252, %v245
  %v393 = vpack.c.bf16 %v253, %v246
  %v394 = vpack.c.bf16 %v254, %v247
  %v395 = vpack.c.bf16 %v255, %v248
  %v396 = vpack.c.bf16 %v256, %v249
  %v397 = vpack.c.bf16 %v257, %v250
  %v398 = vpack.c.bf16 %v265, %v258
  %v399 = vpack.c.bf16 %v266, %v259
  %v400 = vpack.c.bf16 %v267, %v260
  %v401 = vpack.c.bf16 %v268, %v261
  %v402 = vpack.c.bf16 %v269, %v262
  %v403 = vpack.c.bf16 %v270, %v263
  %v404 = vpack.c.bf16 %v271, %v264
  %v405 = vpack.c.bf16 %v279, %v272
  %v406 = vpack.c.bf16 %v280, %v273
  %v407 = vpack.c.bf16 %v281, %v274
  %v408 = vpack.c.bf16 %v282, %v275
  %v409 = vpack.c.bf16 %v283, %v276
  %v410 = vpack.c.bf16 %v284, %v277
  %v411 = vpack.c.bf16 %v285, %v278
  %v412 = vpack.c.bf16 %v293, %v286
  %v413 = vpack.c.bf16 %v294, %v287
  %v414 = vpack.c.bf16 %v295, %v288
  %v415 = vpack.c.bf16 %v296, %v289
  %v416 = vpack.c.bf16 %v297, %v290
  %v417 = vpack.c.bf16 %v298, %v291
  %v418 = vpack.c.bf16 %v299, %v292
  %v419 = vpack.c.bf16 %v307, %v300
  %v420 = vpack.c.bf16 %v308, %v301
  %v421 = vpack.c.bf16 %v309, %v302
  %v422 = vpack.c.bf16 %v310, %v303
  %v423 = vpack.c.bf16 %v311, %v304
  %v424 = vpack.c.bf16 %v312, %v305
  %v425 = vpack.c.bf16 %v313, %v306
  %v426 = vld [vmem:[%s3] sm:$0xf]
  %v427 = vld [vmem:[%s3 + $0x4] sm:$0xf]
  %v428 = vld [vmem:[%s3 + $0x8] sm:$0xf]
  %v429 = vld [vmem:[%s3 + $0xc] sm:$0xf]
  %v430 = vld [vmem:[%s3 + $0x10] sm:$0xf]
  %v431 = vld [vmem:[%s3 + $0x14] sm:$0xf]
  %v432 = vld [vmem:[%s3 + $0x18] sm:$0xf]
  %v433 = vld [vmem:[%s3 + $0x1c] sm:$0xf]
  %v434 = vld [vmem:[%s3 + $0x20] sm:$0xf]
  %v435 = vld [vmem:[%s3 + $0x24] sm:$0xf]
  %v436 = vld [vmem:[%s3 + $0x28] sm:$0xf]
  %v437 = vld [vmem:[%s3 + $0x2c] sm:$0xf]
  %v438 = vld [vmem:[%s3 + $0x30] sm:$0xf]
  %v439 = vld [vmem:[%s3 + $0x34] sm:$0xf]
  %v440 = vld [vmem:[%s3 + $0x38] sm:$0xf]
  %v441 = vld [vmem:[%s3 + $0x3c] sm:$0xf]
  %v442 = vld [vmem:[%s3 + $0x40] sm:$0xf]
  %v443 = vld [vmem:[%s3 + $0x44] sm:$0xf]
  %v444 = vld [vmem:[%s3 + $0x48] sm:$0xf]
  %v445 = vld [vmem:[%s3 + $0x4c] sm:$0xf]
  %v446 = vld [vmem:[%s3 + $0x50] sm:$0xf]
  %v447 = vld [vmem:[%s3 + $0x54] sm:$0xf]
  %v448 = vld [vmem:[%s3 + $0x58] sm:$0xf]
  %v449 = vld [vmem:[%s3 + $0x5c] sm:$0xf]
  %v450 = vld [vmem:[%s3 + $0x60] sm:$0xf]
  %v451 = vld [vmem:[%s3 + $0x64] sm:$0xf]
  %v452 = vld [vmem:[%s3 + $0x68] sm:$0xf]
  %v453 = vld [vmem:[%s3 + $0x6c] sm:$0xf]
  %v454 = vld [vmem:[%s3 + $0x70] sm:$0xf]
  %v455 = vld [vmem:[%s3 + $0x74] sm:$0xf]
  %v456 = vld [vmem:[%s3 + $0x78] sm:$0xf]
  %v457 = vld [vmem:[%s3 + $0x7c] sm:$0xf]
  %v458 = vld [vmem:[%s3 + $0x80] sm:$0xf]
  %v459 = vld [vmem:[%s3 + $0x84] sm:$0xf]
  %v460 = vld [vmem:[%s3 + $0x88] sm:$0xf]
  %v461 = vld [vmem:[%s3 + $0x8c] sm:$0xf]
  %v462 = vld [vmem:[%s3 + $0x90] sm:$0xf]
  %v463 = vld [vmem:[%s3 + $0x94] sm:$0xf]
  %v464 = vld [vmem:[%s3 + $0x98] sm:$0xf]
  %v465 = vld [vmem:[%s3 + $0x9c] sm:$0xf]
  %v466 = vld [vmem:[%s3 + $0xa0] sm:$0xf]
  %v467 = vld [vmem:[%s3 + $0xa4] sm:$0xf]
  %v468 = vld [vmem:[%s3 + $0xa8] sm:$0xf]
  %v469 = vld [vmem:[%s3 + $0xac] sm:$0xf]
  %v470 = vld [vmem:[%s3 + $0xb0] sm:$0xf]
  %v471 = vld [vmem:[%s3 + $0xb4] sm:$0xf]
  %v472 = vld [vmem:[%s3 + $0xb8] sm:$0xf]
  %v473 = vld [vmem:[%s3 + $0xbc] sm:$0xf]
  %v474 = vld [vmem:[%s3 + $0xc0] sm:$0xf]
  %v475 = vld [vmem:[%s3 + $0xc4] sm:$0xf]
  %v476 = vld [vmem:[%s3 + $0xc8] sm:$0xf]
  %v477 = vld [vmem:[%s3 + $0xcc] sm:$0xf]
  %v478 = vld [vmem:[%s3 + $0xd0] sm:$0xf]
  %v479 = vld [vmem:[%s3 + $0xd4] sm:$0xf]
  %v480 = vld [vmem:[%s3 + $0xd8] sm:$0xf]
  %v481 = vld [vmem:[%s3 + $0xdc] sm:$0xf]
  %v482 = vld [vmem:[%s3 + $0xe0] sm:$0xf]
  %v483 = vld [vmem:[%s3 + $0xe4] sm:$0xf]
  %v484 = vld [vmem:[%s3 + $0xe8] sm:$0xf]
  %v485 = vld [vmem:[%s3 + $0xec] sm:$0xf]
  %v486 = vld [vmem:[%s3 + $0xf0] sm:$0xf]
  %v487 = vld [vmem:[%s3 + $0xf4] sm:$0xf]
  %v488 = vld [vmem:[%s3 + $0xf8] sm:$0xf]
  %v489 = vld [vmem:[%s3 + $0xfc] sm:$0xf]
  %v490 = vld [vmem:[%s3 + $0x100] sm:$0xf]
  %v491 = vld [vmem:[%s3 + $0x104] sm:$0xf]
  %v492 = vld [vmem:[%s3 + $0x108] sm:$0xf]
  %v493 = vld [vmem:[%s3 + $0x10c] sm:$0xf]
  %v494 = vld [vmem:[%s3 + $0x110] sm:$0xf]
  %v495 = vld [vmem:[%s3 + $0x114] sm:$0xf]
  %v496 = vld [vmem:[%s3 + $0x118] sm:$0xf]
  %v497 = vld [vmem:[%s3 + $0x11c] sm:$0xf]
  %v498 = vld [vmem:[%s3 + $0x120] sm:$0xf]
  %v499 = vld [vmem:[%s3 + $0x124] sm:$0xf]
  %v500 = vld [vmem:[%s3 + $0x128] sm:$0xf]
  %v501 = vld [vmem:[%s3 + $0x12c] sm:$0xf]
  %v502 = vld [vmem:[%s3 + $0x130] sm:$0xf]
  %v503 = vld [vmem:[%s3 + $0x134] sm:$0xf]
  %v504 = vld [vmem:[%s3 + $0x138] sm:$0xf]
  %v505 = vld [vmem:[%s3 + $0x13c] sm:$0xf]
  %v506 = vld [vmem:[%s3 + $0x140] sm:$0xf]
  %v507 = vld [vmem:[%s3 + $0x144] sm:$0xf]
  %v508 = vld [vmem:[%s3 + $0x148] sm:$0xf]
  %v509 = vld [vmem:[%s3 + $0x14c] sm:$0xf]
  %v510 = vld [vmem:[%s3 + $0x150] sm:$0xf]
  %v511 = vld [vmem:[%s3 + $0x154] sm:$0xf]
  %v512 = vld [vmem:[%s3 + $0x158] sm:$0xf]
  %v513 = vld [vmem:[%s3 + $0x15c] sm:$0xf]
  %v514 = vld [vmem:[%s3 + $0x160] sm:$0xf]
  %v515 = vld [vmem:[%s3 + $0x164] sm:$0xf]
  %v516 = vld [vmem:[%s3 + $0x168] sm:$0xf]
  %v517 = vld [vmem:[%s3 + $0x16c] sm:$0xf]
  %v518 = vld [vmem:[%s3 + $0x170] sm:$0xf]
  %v519 = vld [vmem:[%s3 + $0x174] sm:$0xf]
  %v520 = vld [vmem:[%s3 + $0x178] sm:$0xf]
  %v521 = vld [vmem:[%s3 + $0x17c] sm:$0xf]
  %v522 = vld [vmem:[%s3 + $0x180] sm:$0xf]
  %v523 = vld [vmem:[%s3 + $0x184] sm:$0xf]
  %v622 = vunpack.c.l.b16 %v426
  %v623 = vunpack.c.l.b16 %v427
  %v624 = vunpack.c.l.b16 %v428
  %v625 = vunpack.c.l.b16 %v429
  %v626 = vunpack.c.l.b16 %v430
  %v627 = vunpack.c.l.b16 %v431
  %v628 = vunpack.c.l.b16 %v432
  %v629 = vunpack.c.l.b16 %v433
  %v630 = vunpack.c.l.b16 %v434
  %v631 = vunpack.c.l.b16 %v435
  %v632 = vunpack.c.l.b16 %v436
  %v633 = vunpack.c.l.b16 %v437
  %v634 = vunpack.c.l.b16 %v438
  %v635 = vunpack.c.l.b16 %v439
  %v636 = vunpack.c.l.b16 %v440
  %v637 = vunpack.c.l.b16 %v441
  %v638 = vunpack.c.l.b16 %v442
  %v639 = vunpack.c.l.b16 %v443
  %v640 = vunpack.c.l.b16 %v444
  %v641 = vunpack.c.l.b16 %v445
  %v642 = vunpack.c.l.b16 %v446
  %v643 = vunpack.c.l.b16 %v447
  %v644 = vunpack.c.l.b16 %v448
  %v645 = vunpack.c.l.b16 %v449
  %v646 = vunpack.c.l.b16 %v450
  %v647 = vunpack.c.l.b16 %v451
  %v648 = vunpack.c.l.b16 %v452
  %v649 = vunpack.c.l.b16 %v453
  %v650 = vunpack.c.l.b16 %v454
  %v651 = vunpack.c.l.b16 %v455
  %v652 = vunpack.c.l.b16 %v456
  %v653 = vunpack.c.l.b16 %v457
  %v654 = vunpack.c.l.b16 %v458
  %v655 = vunpack.c.l.b16 %v459
  %v656 = vunpack.c.l.b16 %v460
  %v657 = vunpack.c.l.b16 %v461
  %v658 = vunpack.c.l.b16 %v462
  %v659 = vunpack.c.l.b16 %v463
  %v660 = vunpack.c.l.b16 %v464
  %v661 = vunpack.c.l.b16 %v465
  %v662 = vunpack.c.l.b16 %v466
  %v663 = vunpack.c.l.b16 %v467
  %v664 = vunpack.c.l.b16 %v468
  %v665 = vunpack.c.l.b16 %v469
  %v666 = vunpack.c.l.b16 %v470
  %v667 = vunpack.c.l.b16 %v471
  %v668 = vunpack.c.l.b16 %v472
  %v669 = vunpack.c.l.b16 %v473
  %v670 = vunpack.c.l.b16 %v474
  %v671 = vunpack.c.l.b16 %v475
  %v672 = vunpack.c.l.b16 %v476
  %v673 = vunpack.c.l.b16 %v477
  %v674 = vunpack.c.l.b16 %v478
  %v675 = vunpack.c.l.b16 %v479
  %v676 = vunpack.c.l.b16 %v480
  %v677 = vunpack.c.l.b16 %v481
  %v678 = vunpack.c.l.b16 %v482
  %v679 = vunpack.c.l.b16 %v483
  %v680 = vunpack.c.l.b16 %v484
  %v681 = vunpack.c.l.b16 %v485
  %v682 = vunpack.c.l.b16 %v486
  %v683 = vunpack.c.l.b16 %v487
  %v684 = vunpack.c.l.b16 %v488
  %v685 = vunpack.c.l.b16 %v489
  %v686 = vunpack.c.l.b16 %v490
  %v687 = vunpack.c.l.b16 %v491
  %v688 = vunpack.c.l.b16 %v492
  %v689 = vunpack.c.l.b16 %v493
  %v690 = vunpack.c.l.b16 %v494
  %v691 = vunpack.c.l.b16 %v495
  %v692 = vunpack.c.l.b16 %v496
  %v693 = vunpack.c.l.b16 %v497
  %v694 = vunpack.c.l.b16 %v498
  %v695 = vunpack.c.l.b16 %v499
  %v696 = vunpack.c.l.b16 %v500
  %v697 = vunpack.c.l.b16 %v501
  %v698 = vunpack.c.l.b16 %v502
  %v699 = vunpack.c.l.b16 %v503
  %v700 = vunpack.c.l.b16 %v504
  %v701 = vunpack.c.l.b16 %v505
  %v702 = vunpack.c.l.b16 %v506
  %v703 = vunpack.c.l.b16 %v507
  %v704 = vunpack.c.l.b16 %v508
  %v705 = vunpack.c.l.b16 %v509
  %v706 = vunpack.c.l.b16 %v510
  %v707 = vunpack.c.l.b16 %v511
  %v708 = vunpack.c.l.b16 %v512
  %v709 = vunpack.c.l.b16 %v513
  %v710 = vunpack.c.l.b16 %v514
  %v711 = vunpack.c.l.b16 %v515
  %v712 = vunpack.c.l.b16 %v516
  %v713 = vunpack.c.l.b16 %v517
  %v714 = vunpack.c.l.b16 %v518
  %v715 = vunpack.c.l.b16 %v519
  %v716 = vunpack.c.l.b16 %v520
  %v717 = vunpack.c.l.b16 %v521
  %v718 = vunpack.c.l.b16 %v522
  %v719 = vunpack.c.l.b16 %v523
  %v720 = vpack.c.b16 %v623, %v622
  %v721 = vpack.c.b16 %v625, %v624
  %v722 = vpack.c.b16 %v627, %v626
  %v723 = vpack.c.b16 %v629, %v628
  %v724 = vpack.c.b16 %v631, %v630
  %v725 = vpack.c.b16 %v633, %v632
  %v726 = vpack.c.b16 %v635, %v634
  %v727 = vpack.c.b16 %v637, %v636
  %v728 = vpack.c.b16 %v639, %v638
  %v729 = vpack.c.b16 %v641, %v640
  %v730 = vpack.c.b16 %v643, %v642
  %v731 = vpack.c.b16 %v645, %v644
  %v732 = vpack.c.b16 %v647, %v646
  %v733 = vpack.c.b16 %v649, %v648
  %v734 = vpack.c.b16 %v651, %v650
  %v735 = vpack.c.b16 %v653, %v652
  %v736 = vpack.c.b16 %v655, %v654
  %v737 = vpack.c.b16 %v657, %v656
  %v738 = vpack.c.b16 %v659, %v658
  %v739 = vpack.c.b16 %v661, %v660
  %v740 = vpack.c.b16 %v663, %v662
  %v741 = vpack.c.b16 %v665, %v664
  %v742 = vpack.c.b16 %v667, %v666
  %v743 = vpack.c.b16 %v669, %v668
  %v744 = vpack.c.b16 %v671, %v670
  %v745 = vpack.c.b16 %v673, %v672
  %v746 = vpack.c.b16 %v675, %v674
  %v747 = vpack.c.b16 %v677, %v676
  %v748 = vpack.c.b16 %v679, %v678
  %v749 = vpack.c.b16 %v681, %v680
  %v750 = vpack.c.b16 %v683, %v682
  %v751 = vpack.c.b16 %v685, %v684
  %v752 = vpack.c.b16 %v687, %v686
  %v753 = vpack.c.b16 %v689, %v688
  %v754 = vpack.c.b16 %v691, %v690
  %v755 = vpack.c.b16 %v693, %v692
  %v756 = vpack.c.b16 %v695, %v694
  %v757 = vpack.c.b16 %v697, %v696
  %v758 = vpack.c.b16 %v699, %v698
  %v759 = vpack.c.b16 %v701, %v700
  %v760 = vpack.c.b16 %v703, %v702
  %v761 = vpack.c.b16 %v705, %v704
  %v762 = vpack.c.b16 %v707, %v706
  %v763 = vpack.c.b16 %v709, %v708
  %v764 = vpack.c.b16 %v711, %v710
  %v765 = vpack.c.b16 %v713, %v712
  %v766 = vpack.c.b16 %v715, %v714
  %v767 = vpack.c.b16 %v717, %v716
  %v768 = vpack.c.b16 %v719, %v718
  %vm818 = vcmask 130048
  %v820 = vsel %vm818, %v320, 0
  %v823 = vsel %vm818, %v327, 0
  %v826 = vsel %vm818, %v334, 0
  %v829 = vsel %vm818, %v341, 0
  %v832 = vsel %vm818, %v348, 0
  %v835 = vsel %vm818, %v355, 0
  %v838 = vsel %vm818, %v362, 0
  %v841 = vsel %vm818, %v369, 0
  %v844 = vsel %vm818, %v376, 0
  %v847 = vsel %vm818, %v383, 0
  %v850 = vsel %vm818, %v390, 0
  %v853 = vsel %vm818, %v397, 0
  %v856 = vsel %vm818, %v404, 0
  %v859 = vsel %vm818, %v411, 0
  %v862 = vsel %vm818, %v418, 0
  %v865 = vsel %vm818, %v425, 0
  %867 = vmatpush.bf16.msra.mxu0 %v727
  %868 = vmatpush.bf16.msra.mxu0 %v726
  %869 = vmatpush.bf16.msra.mxu0 %v725
  %870 = vmatpush.bf16.msra.mxu0 %v724
  %871 = vmatpush.bf16.msra.mxu0 %v723
  %872 = vmatpush.bf16.msra.mxu0 %v722
  %873 = vmatpush.bf16.msra.mxu0 %v721
  %874 = vmatpush.bf16.msra.mxu0 %v720
  %875 = vmatmul.bf16.gmra.mxu0 %v314
  %v876 = vpop.f32.mrf.mxu0
  %v877 = vadd.f32 0.0, %v876
  %v878 = vpop.f32.mrf.mxu0
  %v879 = vadd.f32 0.0, %v878
  %880 = vmatmul.bf16.gmra.mxu0 %v321
  %v881 = vpop.f32.mrf.mxu0
  %v882 = vadd.f32 0.0, %v881
  %v883 = vpop.f32.mrf.mxu0
  %v884 = vadd.f32 0.0, %v883
  %885 = vmatmul.bf16.gmra.mxu0 %v328
  %v886 = vpop.f32.mrf.mxu0
  %v887 = vadd.f32 0.0, %v886
  %v888 = vpop.f32.mrf.mxu0
  %v889 = vadd.f32 0.0, %v888
  %890 = vmatmul.bf16.gmra.mxu0 %v335
  %v891 = vpop.f32.mrf.mxu0
  %v892 = vadd.f32 0.0, %v891
  %v893 = vpop.f32.mrf.mxu0
  %v894 = vadd.f32 0.0, %v893
  %895 = vmatmul.bf16.gmra.mxu0 %v342
  %v896 = vpop.f32.mrf.mxu0
  %v897 = vadd.f32 0.0, %v896
  %v898 = vpop.f32.mrf.mxu0
  %v899 = vadd.f32 0.0, %v898
  %900 = vmatmul.bf16.gmra.mxu0 %v349
  %v901 = vpop.f32.mrf.mxu0
  %v902 = vadd.f32 0.0, %v901
  %v903 = vpop.f32.mrf.mxu0
  %v904 = vadd.f32 0.0, %v903
  %905 = vmatmul.bf16.gmra.mxu0 %v356
  %v906 = vpop.f32.mrf.mxu0
  %v907 = vadd.f32 0.0, %v906
  %v908 = vpop.f32.mrf.mxu0
  %v909 = vadd.f32 0.0, %v908
  %910 = vmatmul.bf16.gmra.mxu0 %v363
  %v911 = vpop.f32.mrf.mxu0
  %v912 = vadd.f32 0.0, %v911
  %v913 = vpop.f32.mrf.mxu0
  %v914 = vadd.f32 0.0, %v913
  %915 = vmatmul.bf16.gmra.mxu0 %v370
  %v916 = vpop.f32.mrf.mxu0
  %v917 = vadd.f32 0.0, %v916
  %v918 = vpop.f32.mrf.mxu0
  %v919 = vadd.f32 0.0, %v918
  %920 = vmatmul.bf16.gmra.mxu0 %v377
  %v921 = vpop.f32.mrf.mxu0
  %v922 = vadd.f32 0.0, %v921
  %v923 = vpop.f32.mrf.mxu0
  %v924 = vadd.f32 0.0, %v923
  %925 = vmatmul.bf16.gmra.mxu0 %v384
  %v926 = vpop.f32.mrf.mxu0
  %v927 = vadd.f32 0.0, %v926
  %v928 = vpop.f32.mrf.mxu0
  %v929 = vadd.f32 0.0, %v928
  %930 = vmatmul.bf16.gmra.mxu0 %v391
  %v931 = vpop.f32.mrf.mxu0
  %v932 = vadd.f32 0.0, %v931
  %v933 = vpop.f32.mrf.mxu0
  %v934 = vadd.f32 0.0, %v933
  %935 = vmatmul.bf16.gmra.mxu0 %v398
  %v936 = vpop.f32.mrf.mxu0
  %v937 = vadd.f32 0.0, %v936
  %v938 = vpop.f32.mrf.mxu0
  %v939 = vadd.f32 0.0, %v938
  %940 = vmatmul.bf16.gmra.mxu0 %v405
  %v941 = vpop.f32.mrf.mxu0
  %v942 = vadd.f32 0.0, %v941
  %v943 = vpop.f32.mrf.mxu0
  %v944 = vadd.f32 0.0, %v943
  %945 = vmatmul.bf16.gmra.mxu0 %v412
  %v946 = vpop.f32.mrf.mxu0
  %v947 = vadd.f32 0.0, %v946
  %v948 = vpop.f32.mrf.mxu0
  %v949 = vadd.f32 0.0, %v948
  %950 = vmatmul.bf16.gmra.mxu0 %v419
  %v951 = vpop.f32.mrf.mxu0
  %v952 = vadd.f32 0.0, %v951
  %v953 = vpop.f32.mrf.mxu0
  %v954 = vadd.f32 0.0, %v953
  %955 = vdwg.mxu0
  %956 = vmatpush.bf16.msra.mxu0 %v735
  %957 = vmatpush.bf16.msra.mxu0 %v734
  %958 = vmatpush.bf16.msra.mxu0 %v733
  %959 = vmatpush.bf16.msra.mxu0 %v732
  %960 = vmatpush.bf16.msra.mxu0 %v731
  %961 = vmatpush.bf16.msra.mxu0 %v730
  %962 = vmatpush.bf16.msra.mxu0 %v729
  %963 = vmatpush.bf16.msra.mxu0 %v728
  %964 = vmatmul.bf16.gmra.mxu0 %v315
  %v965 = vpop.f32.mrf.mxu0
  %v966 = vadd.f32 %v877, %v965
  %v967 = vpop.f32.mrf.mxu0
  %v968 = vadd.f32 %v879, %v967
  %969 = vmatmul.bf16.gmra.mxu0 %v322
  %v970 = vpop.f32.mrf.mxu0
  %v971 = vadd.f32 %v882, %v970
  %v972 = vpop.f32.mrf.mxu0
  %v973 = vadd.f32 %v884, %v972
  %974 = vmatmul.bf16.gmra.mxu0 %v329
  %v975 = vpop.f32.mrf.mxu0
  %v976 = vadd.f32 %v887, %v975
  %v977 = vpop.f32.mrf.mxu0
  %v978 = vadd.f32 %v889, %v977
  %979 = vmatmul.bf16.gmra.mxu0 %v336
  %v980 = vpop.f32.mrf.mxu0
  %v981 = vadd.f32 %v892, %v980
  %v982 = vpop.f32.mrf.mxu0
  %v983 = vadd.f32 %v894, %v982
  %984 = vmatmul.bf16.gmra.mxu0 %v343
  %v985 = vpop.f32.mrf.mxu0
  %v986 = vadd.f32 %v897, %v985
  %v987 = vpop.f32.mrf.mxu0
  %v988 = vadd.f32 %v899, %v987
  %989 = vmatmul.bf16.gmra.mxu0 %v350
  %v990 = vpop.f32.mrf.mxu0
  %v991 = vadd.f32 %v902, %v990
  %v992 = vpop.f32.mrf.mxu0
  %v993 = vadd.f32 %v904, %v992
  %994 = vmatmul.bf16.gmra.mxu0 %v357
  %v995 = vpop.f32.mrf.mxu0
  %v996 = vadd.f32 %v907, %v995
  %v997 = vpop.f32.mrf.mxu0
  %v998 = vadd.f32 %v909, %v997
  %999 = vmatmul.bf16.gmra.mxu0 %v364
  %v1000 = vpop.f32.mrf.mxu0
  %v1001 = vadd.f32 %v912, %v1000
  %v1002 = vpop.f32.mrf.mxu0
  %v1003 = vadd.f32 %v914, %v1002
  %1004 = vmatmul.bf16.gmra.mxu0 %v371
  %v1005 = vpop.f32.mrf.mxu0
  %v1006 = vadd.f32 %v917, %v1005
  %v1007 = vpop.f32.mrf.mxu0
  %v1008 = vadd.f32 %v919, %v1007
  %1009 = vmatmul.bf16.gmra.mxu0 %v378
  %v1010 = vpop.f32.mrf.mxu0
  %v1011 = vadd.f32 %v922, %v1010
  %v1012 = vpop.f32.mrf.mxu0
  %v1013 = vadd.f32 %v924, %v1012
  %1014 = vmatmul.bf16.gmra.mxu0 %v385
  %v1015 = vpop.f32.mrf.mxu0
  %v1016 = vadd.f32 %v927, %v1015
  %v1017 = vpop.f32.mrf.mxu0
  %v1018 = vadd.f32 %v929, %v1017
  %1019 = vmatmul.bf16.gmra.mxu0 %v392
  %v1020 = vpop.f32.mrf.mxu0
  %v1021 = vadd.f32 %v932, %v1020
  %v1022 = vpop.f32.mrf.mxu0
  %v1023 = vadd.f32 %v934, %v1022
  %1024 = vmatmul.bf16.gmra.mxu0 %v399
  %v1025 = vpop.f32.mrf.mxu0
  %v1026 = vadd.f32 %v937, %v1025
  %v1027 = vpop.f32.mrf.mxu0
  %v1028 = vadd.f32 %v939, %v1027
  %1029 = vmatmul.bf16.gmra.mxu0 %v406
  %v1030 = vpop.f32.mrf.mxu0
  %v1031 = vadd.f32 %v942, %v1030
  %v1032 = vpop.f32.mrf.mxu0
  %v1033 = vadd.f32 %v944, %v1032
  %1034 = vmatmul.bf16.gmra.mxu0 %v413
  %v1035 = vpop.f32.mrf.mxu0
  %v1036 = vadd.f32 %v947, %v1035
  %v1037 = vpop.f32.mrf.mxu0
  %v1038 = vadd.f32 %v949, %v1037
  %1039 = vmatmul.bf16.gmra.mxu0 %v420
  %v1040 = vpop.f32.mrf.mxu0
  %v1041 = vadd.f32 %v952, %v1040
  %v1042 = vpop.f32.mrf.mxu0
  %v1043 = vadd.f32 %v954, %v1042
  %1044 = vdwg.mxu0
  %1045 = vmatpush.bf16.msra.mxu0 %v743
  %1046 = vmatpush.bf16.msra.mxu0 %v742
  %1047 = vmatpush.bf16.msra.mxu0 %v741
  %1048 = vmatpush.bf16.msra.mxu0 %v740
  %1049 = vmatpush.bf16.msra.mxu0 %v739
  %1050 = vmatpush.bf16.msra.mxu0 %v738
  %1051 = vmatpush.bf16.msra.mxu0 %v737
  %1052 = vmatpush.bf16.msra.mxu0 %v736
  %1053 = vmatmul.bf16.gmra.mxu0 %v316
  %v1054 = vpop.f32.mrf.mxu0
  %v1055 = vadd.f32 %v966, %v1054
  %v1056 = vpop.f32.mrf.mxu0
  %v1057 = vadd.f32 %v968, %v1056
  %1058 = vmatmul.bf16.gmra.mxu0 %v323
  %v1059 = vpop.f32.mrf.mxu0
  %v1060 = vadd.f32 %v971, %v1059
  %v1061 = vpop.f32.mrf.mxu0
  %v1062 = vadd.f32 %v973, %v1061
  %1063 = vmatmul.bf16.gmra.mxu0 %v330
  %v1064 = vpop.f32.mrf.mxu0
  %v1065 = vadd.f32 %v976, %v1064
  %v1066 = vpop.f32.mrf.mxu0
  %v1067 = vadd.f32 %v978, %v1066
  %1068 = vmatmul.bf16.gmra.mxu0 %v337
  %v1069 = vpop.f32.mrf.mxu0
  %v1070 = vadd.f32 %v981, %v1069
  %v1071 = vpop.f32.mrf.mxu0
  %v1072 = vadd.f32 %v983, %v1071
  %1073 = vmatmul.bf16.gmra.mxu0 %v344
  %v1074 = vpop.f32.mrf.mxu0
  %v1075 = vadd.f32 %v986, %v1074
  %v1076 = vpop.f32.mrf.mxu0
  %v1077 = vadd.f32 %v988, %v1076
  %1078 = vmatmul.bf16.gmra.mxu0 %v351
  %v1079 = vpop.f32.mrf.mxu0
  %v1080 = vadd.f32 %v991, %v1079
  %v1081 = vpop.f32.mrf.mxu0
  %v1082 = vadd.f32 %v993, %v1081
  %1083 = vmatmul.bf16.gmra.mxu0 %v358
  %v1084 = vpop.f32.mrf.mxu0
  %v1085 = vadd.f32 %v996, %v1084
  %v1086 = vpop.f32.mrf.mxu0
  %v1087 = vadd.f32 %v998, %v1086
  %1088 = vmatmul.bf16.gmra.mxu0 %v365
  %v1089 = vpop.f32.mrf.mxu0
  %v1090 = vadd.f32 %v1001, %v1089
  %v1091 = vpop.f32.mrf.mxu0
  %v1092 = vadd.f32 %v1003, %v1091
  %1093 = vmatmul.bf16.gmra.mxu0 %v372
  %v1094 = vpop.f32.mrf.mxu0
  %v1095 = vadd.f32 %v1006, %v1094
  %v1096 = vpop.f32.mrf.mxu0
  %v1097 = vadd.f32 %v1008, %v1096
  %1098 = vmatmul.bf16.gmra.mxu0 %v379
  %v1099 = vpop.f32.mrf.mxu0
  %v1100 = vadd.f32 %v1011, %v1099
  %v1101 = vpop.f32.mrf.mxu0
  %v1102 = vadd.f32 %v1013, %v1101
  %1103 = vmatmul.bf16.gmra.mxu0 %v386
  %v1104 = vpop.f32.mrf.mxu0
  %v1105 = vadd.f32 %v1016, %v1104
  %v1106 = vpop.f32.mrf.mxu0
  %v1107 = vadd.f32 %v1018, %v1106
  %1108 = vmatmul.bf16.gmra.mxu0 %v393
  %v1109 = vpop.f32.mrf.mxu0
  %v1110 = vadd.f32 %v1021, %v1109
  %v1111 = vpop.f32.mrf.mxu0
  %v1112 = vadd.f32 %v1023, %v1111
  %1113 = vmatmul.bf16.gmra.mxu0 %v400
  %v1114 = vpop.f32.mrf.mxu0
  %v1115 = vadd.f32 %v1026, %v1114
  %v1116 = vpop.f32.mrf.mxu0
  %v1117 = vadd.f32 %v1028, %v1116
  %1118 = vmatmul.bf16.gmra.mxu0 %v407
  %v1119 = vpop.f32.mrf.mxu0
  %v1120 = vadd.f32 %v1031, %v1119
  %v1121 = vpop.f32.mrf.mxu0
  %v1122 = vadd.f32 %v1033, %v1121
  %1123 = vmatmul.bf16.gmra.mxu0 %v414
  %v1124 = vpop.f32.mrf.mxu0
  %v1125 = vadd.f32 %v1036, %v1124
  %v1126 = vpop.f32.mrf.mxu0
  %v1127 = vadd.f32 %v1038, %v1126
  %1128 = vmatmul.bf16.gmra.mxu0 %v421
  %v1129 = vpop.f32.mrf.mxu0
  %v1130 = vadd.f32 %v1041, %v1129
  %v1131 = vpop.f32.mrf.mxu0
  %v1132 = vadd.f32 %v1043, %v1131
  %1133 = vdwg.mxu0
  %1134 = vmatpush.bf16.msra.mxu0 %v751
  %1135 = vmatpush.bf16.msra.mxu0 %v750
  %1136 = vmatpush.bf16.msra.mxu0 %v749
  %1137 = vmatpush.bf16.msra.mxu0 %v748
  %1138 = vmatpush.bf16.msra.mxu0 %v747
  %1139 = vmatpush.bf16.msra.mxu0 %v746
  %1140 = vmatpush.bf16.msra.mxu0 %v745
  %1141 = vmatpush.bf16.msra.mxu0 %v744
  %1142 = vmatmul.bf16.gmra.mxu0 %v317
  %v1143 = vpop.f32.mrf.mxu0
  %v1144 = vadd.f32 %v1055, %v1143
  %v1145 = vpop.f32.mrf.mxu0
  %v1146 = vadd.f32 %v1057, %v1145
  %1147 = vmatmul.bf16.gmra.mxu0 %v324
  %v1148 = vpop.f32.mrf.mxu0
  %v1149 = vadd.f32 %v1060, %v1148
  %v1150 = vpop.f32.mrf.mxu0
  %v1151 = vadd.f32 %v1062, %v1150
  %1152 = vmatmul.bf16.gmra.mxu0 %v331
  %v1153 = vpop.f32.mrf.mxu0
  %v1154 = vadd.f32 %v1065, %v1153
  %v1155 = vpop.f32.mrf.mxu0
  %v1156 = vadd.f32 %v1067, %v1155
  %1157 = vmatmul.bf16.gmra.mxu0 %v338
  %v1158 = vpop.f32.mrf.mxu0
  %v1159 = vadd.f32 %v1070, %v1158
  %v1160 = vpop.f32.mrf.mxu0
  %v1161 = vadd.f32 %v1072, %v1160
  %1162 = vmatmul.bf16.gmra.mxu0 %v345
  %v1163 = vpop.f32.mrf.mxu0
  %v1164 = vadd.f32 %v1075, %v1163
  %v1165 = vpop.f32.mrf.mxu0
  %v1166 = vadd.f32 %v1077, %v1165
  %1167 = vmatmul.bf16.gmra.mxu0 %v352
  %v1168 = vpop.f32.mrf.mxu0
  %v1169 = vadd.f32 %v1080, %v1168
  %v1170 = vpop.f32.mrf.mxu0
  %v1171 = vadd.f32 %v1082, %v1170
  %1172 = vmatmul.bf16.gmra.mxu0 %v359
  %v1173 = vpop.f32.mrf.mxu0
  %v1174 = vadd.f32 %v1085, %v1173
  %v1175 = vpop.f32.mrf.mxu0
  %v1176 = vadd.f32 %v1087, %v1175
  %1177 = vmatmul.bf16.gmra.mxu0 %v366
  %v1178 = vpop.f32.mrf.mxu0
  %v1179 = vadd.f32 %v1090, %v1178
  %v1180 = vpop.f32.mrf.mxu0
  %v1181 = vadd.f32 %v1092, %v1180
  %1182 = vmatmul.bf16.gmra.mxu0 %v373
  %v1183 = vpop.f32.mrf.mxu0
  %v1184 = vadd.f32 %v1095, %v1183
  %v1185 = vpop.f32.mrf.mxu0
  %v1186 = vadd.f32 %v1097, %v1185
  %1187 = vmatmul.bf16.gmra.mxu0 %v380
  %v1188 = vpop.f32.mrf.mxu0
  %v1189 = vadd.f32 %v1100, %v1188
  %v1190 = vpop.f32.mrf.mxu0
  %v1191 = vadd.f32 %v1102, %v1190
  %1192 = vmatmul.bf16.gmra.mxu0 %v387
  %v1193 = vpop.f32.mrf.mxu0
  %v1194 = vadd.f32 %v1105, %v1193
  %v1195 = vpop.f32.mrf.mxu0
  %v1196 = vadd.f32 %v1107, %v1195
  %1197 = vmatmul.bf16.gmra.mxu0 %v394
  %v1198 = vpop.f32.mrf.mxu0
  %v1199 = vadd.f32 %v1110, %v1198
  %v1200 = vpop.f32.mrf.mxu0
  %v1201 = vadd.f32 %v1112, %v1200
  %1202 = vmatmul.bf16.gmra.mxu0 %v401
  %v1203 = vpop.f32.mrf.mxu0
  %v1204 = vadd.f32 %v1115, %v1203
  %v1205 = vpop.f32.mrf.mxu0
  %v1206 = vadd.f32 %v1117, %v1205
  %1207 = vmatmul.bf16.gmra.mxu0 %v408
  %v1208 = vpop.f32.mrf.mxu0
  %v1209 = vadd.f32 %v1120, %v1208
  %v1210 = vpop.f32.mrf.mxu0
  %v1211 = vadd.f32 %v1122, %v1210
  %1212 = vmatmul.bf16.gmra.mxu0 %v415
  %v1213 = vpop.f32.mrf.mxu0
  %v1214 = vadd.f32 %v1125, %v1213
  %v1215 = vpop.f32.mrf.mxu0
  %v1216 = vadd.f32 %v1127, %v1215
  %1217 = vmatmul.bf16.gmra.mxu0 %v422
  %v1218 = vpop.f32.mrf.mxu0
  %v1219 = vadd.f32 %v1130, %v1218
  %v1220 = vpop.f32.mrf.mxu0
  %v1221 = vadd.f32 %v1132, %v1220
  %1222 = vdwg.mxu0
  %1223 = vmatpush.bf16.msra.mxu0 %v759
  %1224 = vmatpush.bf16.msra.mxu0 %v758
  %1225 = vmatpush.bf16.msra.mxu0 %v757
  %1226 = vmatpush.bf16.msra.mxu0 %v756
  %1227 = vmatpush.bf16.msra.mxu0 %v755
  %1228 = vmatpush.bf16.msra.mxu0 %v754
  %1229 = vmatpush.bf16.msra.mxu0 %v753
  %1230 = vmatpush.bf16.msra.mxu0 %v752
  %1231 = vmatmul.bf16.gmra.mxu0 %v318
  %v1232 = vpop.f32.mrf.mxu0
  %v1233 = vadd.f32 %v1144, %v1232
  %v1234 = vpop.f32.mrf.mxu0
  %v1235 = vadd.f32 %v1146, %v1234
  %1236 = vmatmul.bf16.gmra.mxu0 %v325
  %v1237 = vpop.f32.mrf.mxu0
  %v1238 = vadd.f32 %v1149, %v1237
  %v1239 = vpop.f32.mrf.mxu0
  %v1240 = vadd.f32 %v1151, %v1239
  %1241 = vmatmul.bf16.gmra.mxu0 %v332
  %v1242 = vpop.f32.mrf.mxu0
  %v1243 = vadd.f32 %v1154, %v1242
  %v1244 = vpop.f32.mrf.mxu0
  %v1245 = vadd.f32 %v1156, %v1244
  %1246 = vmatmul.bf16.gmra.mxu0 %v339
  %v1247 = vpop.f32.mrf.mxu0
  %v1248 = vadd.f32 %v1159, %v1247
  %v1249 = vpop.f32.mrf.mxu0
  %v1250 = vadd.f32 %v1161, %v1249
  %1251 = vmatmul.bf16.gmra.mxu0 %v346
  %v1252 = vpop.f32.mrf.mxu0
  %v1253 = vadd.f32 %v1164, %v1252
  %v1254 = vpop.f32.mrf.mxu0
  %v1255 = vadd.f32 %v1166, %v1254
  %1256 = vmatmul.bf16.gmra.mxu0 %v353
  %v1257 = vpop.f32.mrf.mxu0
  %v1258 = vadd.f32 %v1169, %v1257
  %v1259 = vpop.f32.mrf.mxu0
  %v1260 = vadd.f32 %v1171, %v1259
  %1261 = vmatmul.bf16.gmra.mxu0 %v360
  %v1262 = vpop.f32.mrf.mxu0
  %v1263 = vadd.f32 %v1174, %v1262
  %v1264 = vpop.f32.mrf.mxu0
  %v1265 = vadd.f32 %v1176, %v1264
  %1266 = vmatmul.bf16.gmra.mxu0 %v367
  %v1267 = vpop.f32.mrf.mxu0
  %v1268 = vadd.f32 %v1179, %v1267
  %v1269 = vpop.f32.mrf.mxu0
  %v1270 = vadd.f32 %v1181, %v1269
  %1271 = vmatmul.bf16.gmra.mxu0 %v374
  %v1272 = vpop.f32.mrf.mxu0
  %v1273 = vadd.f32 %v1184, %v1272
  %v1274 = vpop.f32.mrf.mxu0
  %v1275 = vadd.f32 %v1186, %v1274
  %1276 = vmatmul.bf16.gmra.mxu0 %v381
  %v1277 = vpop.f32.mrf.mxu0
  %v1278 = vadd.f32 %v1189, %v1277
  %v1279 = vpop.f32.mrf.mxu0
  %v1280 = vadd.f32 %v1191, %v1279
  %1281 = vmatmul.bf16.gmra.mxu0 %v388
  %v1282 = vpop.f32.mrf.mxu0
  %v1283 = vadd.f32 %v1194, %v1282
  %v1284 = vpop.f32.mrf.mxu0
  %v1285 = vadd.f32 %v1196, %v1284
  %1286 = vmatmul.bf16.gmra.mxu0 %v395
  %v1287 = vpop.f32.mrf.mxu0
  %v1288 = vadd.f32 %v1199, %v1287
  %v1289 = vpop.f32.mrf.mxu0
  %v1290 = vadd.f32 %v1201, %v1289
  %1291 = vmatmul.bf16.gmra.mxu0 %v402
  %v1292 = vpop.f32.mrf.mxu0
  %v1293 = vadd.f32 %v1204, %v1292
  %v1294 = vpop.f32.mrf.mxu0
  %v1295 = vadd.f32 %v1206, %v1294
  %1296 = vmatmul.bf16.gmra.mxu0 %v409
  %v1297 = vpop.f32.mrf.mxu0
  %v1298 = vadd.f32 %v1209, %v1297
  %v1299 = vpop.f32.mrf.mxu0
  %v1300 = vadd.f32 %v1211, %v1299
  %1301 = vmatmul.bf16.gmra.mxu0 %v416
  %v1302 = vpop.f32.mrf.mxu0
  %v1303 = vadd.f32 %v1214, %v1302
  %v1304 = vpop.f32.mrf.mxu0
  %v1305 = vadd.f32 %v1216, %v1304
  %1306 = vmatmul.bf16.gmra.mxu0 %v423
  %v1307 = vpop.f32.mrf.mxu0
  %v1308 = vadd.f32 %v1219, %v1307
  %v1309 = vpop.f32.mrf.mxu0
  %v1310 = vadd.f32 %v1221, %v1309
  %1311 = vdwg.mxu0
  %1312 = vmatpush.bf16.msra.mxu0 %v767
  %1313 = vmatpush.bf16.msra.mxu0 %v766
  %1314 = vmatpush.bf16.msra.mxu0 %v765
  %1315 = vmatpush.bf16.msra.mxu0 %v764
  %1316 = vmatpush.bf16.msra.mxu0 %v763
  %1317 = vmatpush.bf16.msra.mxu0 %v762
  %1318 = vmatpush.bf16.msra.mxu0 %v761
  %1319 = vmatpush.bf16.msra.mxu0 %v760
  %1320 = vmatmul.bf16.gmra.mxu0 %v319
  %v1321 = vpop.f32.mrf.mxu0
  %v1322 = vadd.f32 %v1233, %v1321
  %v1323 = vpop.f32.mrf.mxu0
  %v1324 = vadd.f32 %v1235, %v1323
  %1325 = vmatmul.bf16.gmra.mxu0 %v326
  %v1326 = vpop.f32.mrf.mxu0
  %v1327 = vadd.f32 %v1238, %v1326
  %v1328 = vpop.f32.mrf.mxu0
  %v1329 = vadd.f32 %v1240, %v1328
  %1330 = vmatmul.bf16.gmra.mxu0 %v333
  %v1331 = vpop.f32.mrf.mxu0
  %v1332 = vadd.f32 %v1243, %v1331
  %v1333 = vpop.f32.mrf.mxu0
  %v1334 = vadd.f32 %v1245, %v1333
  %1335 = vmatmul.bf16.gmra.mxu0 %v340
  %v1336 = vpop.f32.mrf.mxu0
  %v1337 = vadd.f32 %v1248, %v1336
  %v1338 = vpop.f32.mrf.mxu0
  %v1339 = vadd.f32 %v1250, %v1338
  %1340 = vmatmul.bf16.gmra.mxu0 %v347
  %v1341 = vpop.f32.mrf.mxu0
  %v1342 = vadd.f32 %v1253, %v1341
  %v1343 = vpop.f32.mrf.mxu0
  %v1344 = vadd.f32 %v1255, %v1343
  %1345 = vmatmul.bf16.gmra.mxu0 %v354
  %v1346 = vpop.f32.mrf.mxu0
  %v1347 = vadd.f32 %v1258, %v1346
  %v1348 = vpop.f32.mrf.mxu0
  %v1349 = vadd.f32 %v1260, %v1348
  %1350 = vmatmul.bf16.gmra.mxu0 %v361
  %v1351 = vpop.f32.mrf.mxu0
  %v1352 = vadd.f32 %v1263, %v1351
  %v1353 = vpop.f32.mrf.mxu0
  %v1354 = vadd.f32 %v1265, %v1353
  %1355 = vmatmul.bf16.gmra.mxu0 %v368
  %v1356 = vpop.f32.mrf.mxu0
  %v1357 = vadd.f32 %v1268, %v1356
  %v1358 = vpop.f32.mrf.mxu0
  %v1359 = vadd.f32 %v1270, %v1358
  %1360 = vmatmul.bf16.gmra.mxu0 %v375
  %v1361 = vpop.f32.mrf.mxu0
  %v1362 = vadd.f32 %v1273, %v1361
  %v1363 = vpop.f32.mrf.mxu0
  %v1364 = vadd.f32 %v1275, %v1363
  %1365 = vmatmul.bf16.gmra.mxu0 %v382
  %v1366 = vpop.f32.mrf.mxu0
  %v1367 = vadd.f32 %v1278, %v1366
  %v1368 = vpop.f32.mrf.mxu0
  %v1369 = vadd.f32 %v1280, %v1368
  %1370 = vmatmul.bf16.gmra.mxu0 %v389
  %v1371 = vpop.f32.mrf.mxu0
  %v1372 = vadd.f32 %v1283, %v1371
  %v1373 = vpop.f32.mrf.mxu0
  %v1374 = vadd.f32 %v1285, %v1373
  %1375 = vmatmul.bf16.gmra.mxu0 %v396
  %v1376 = vpop.f32.mrf.mxu0
  %v1377 = vadd.f32 %v1288, %v1376
  %v1378 = vpop.f32.mrf.mxu0
  %v1379 = vadd.f32 %v1290, %v1378
  %1380 = vmatmul.bf16.gmra.mxu0 %v403
  %v1381 = vpop.f32.mrf.mxu0
  %v1382 = vadd.f32 %v1293, %v1381
  %v1383 = vpop.f32.mrf.mxu0
  %v1384 = vadd.f32 %v1295, %v1383
  %1385 = vmatmul.bf16.gmra.mxu0 %v410
  %v1386 = vpop.f32.mrf.mxu0
  %v1387 = vadd.f32 %v1298, %v1386
  %v1388 = vpop.f32.mrf.mxu0
  %v1389 = vadd.f32 %v1300, %v1388
  %1390 = vmatmul.bf16.gmra.mxu0 %v417
  %v1391 = vpop.f32.mrf.mxu0
  %v1392 = vadd.f32 %v1303, %v1391
  %v1393 = vpop.f32.mrf.mxu0
  %v1394 = vadd.f32 %v1305, %v1393
  %1395 = vmatmul.bf16.gmra.mxu0 %v424
  %v1396 = vpop.f32.mrf.mxu0
  %v1397 = vadd.f32 %v1308, %v1396
  %v1398 = vpop.f32.mrf.mxu0
  %v1399 = vadd.f32 %v1310, %v1398
  %1400 = vdwg.mxu0
  %1401 = vmatpush.bf16.msra.mxu0 0
  %1402 = vmatpush.bf16.msra.mxu0 0
  %1403 = vmatpush.bf16.msra.mxu0 0
  %1404 = vmatpush.bf16.msra.mxu0 0
  %1405 = vmatpush.bf16.msra.mxu0 0
  %1406 = vmatpush.bf16.msra.mxu0 0
  %1407 = vmatpush.bf16.msra.mxu0 0
  %1408 = vmatpush.bf16.msra.mxu0 %v768
  %1409 = vmatmul.bf16.gmra.mxu0 %v820
  %v1410 = vpop.f32.mrf.mxu0
  %v1411 = vadd.f32 %v1322, %v1410
  %v1412 = vpop.f32.mrf.mxu0
  %v1413 = vadd.f32 %v1324, %v1412
  %1414 = vmatmul.bf16.gmra.mxu0 %v823
  %v1415 = vpop.f32.mrf.mxu0
  %v1416 = vadd.f32 %v1327, %v1415
  %v1417 = vpop.f32.mrf.mxu0
  %v1418 = vadd.f32 %v1329, %v1417
  %1419 = vmatmul.bf16.gmra.mxu0 %v826
  %v1420 = vpop.f32.mrf.mxu0
  %v1421 = vadd.f32 %v1332, %v1420
  %v1422 = vpop.f32.mrf.mxu0
  %v1423 = vadd.f32 %v1334, %v1422
  %1424 = vmatmul.bf16.gmra.mxu0 %v829
  %v1425 = vpop.f32.mrf.mxu0
  %v1426 = vadd.f32 %v1337, %v1425
  %v1427 = vpop.f32.mrf.mxu0
  %v1428 = vadd.f32 %v1339, %v1427
  %1429 = vmatmul.bf16.gmra.mxu0 %v832
  %v1430 = vpop.f32.mrf.mxu0
  %v1431 = vadd.f32 %v1342, %v1430
  %v1432 = vpop.f32.mrf.mxu0
  %v1433 = vadd.f32 %v1344, %v1432
  %1434 = vmatmul.bf16.gmra.mxu0 %v835
  %v1435 = vpop.f32.mrf.mxu0
  %v1436 = vadd.f32 %v1347, %v1435
  %v1437 = vpop.f32.mrf.mxu0
  %v1438 = vadd.f32 %v1349, %v1437
  %1439 = vmatmul.bf16.gmra.mxu0 %v838
  %v1440 = vpop.f32.mrf.mxu0
  %v1441 = vadd.f32 %v1352, %v1440
  %v1442 = vpop.f32.mrf.mxu0
  %v1443 = vadd.f32 %v1354, %v1442
  %1444 = vmatmul.bf16.gmra.mxu0 %v841
  %v1445 = vpop.f32.mrf.mxu0
  %v1446 = vadd.f32 %v1357, %v1445
  %v1447 = vpop.f32.mrf.mxu0
  %v1448 = vadd.f32 %v1359, %v1447
  %1449 = vmatmul.bf16.gmra.mxu0 %v844
  %v1450 = vpop.f32.mrf.mxu0
  %v1451 = vadd.f32 %v1362, %v1450
  %v1452 = vpop.f32.mrf.mxu0
  %v1453 = vadd.f32 %v1364, %v1452
  %1454 = vmatmul.bf16.gmra.mxu0 %v847
  %v1455 = vpop.f32.mrf.mxu0
  %v1456 = vadd.f32 %v1367, %v1455
  %v1457 = vpop.f32.mrf.mxu0
  %v1458 = vadd.f32 %v1369, %v1457
  %1459 = vmatmul.bf16.gmra.mxu0 %v850
  %v1460 = vpop.f32.mrf.mxu0
  %v1461 = vadd.f32 %v1372, %v1460
  %v1462 = vpop.f32.mrf.mxu0
  %v1463 = vadd.f32 %v1374, %v1462
  %1464 = vmatmul.bf16.gmra.mxu0 %v853
  %v1465 = vpop.f32.mrf.mxu0
  %v1466 = vadd.f32 %v1377, %v1465
  %v1467 = vpop.f32.mrf.mxu0
  %v1468 = vadd.f32 %v1379, %v1467
  %1469 = vmatmul.bf16.gmra.mxu0 %v856
  %v1470 = vpop.f32.mrf.mxu0
  %v1471 = vadd.f32 %v1382, %v1470
  %v1472 = vpop.f32.mrf.mxu0
  %v1473 = vadd.f32 %v1384, %v1472
  %1474 = vmatmul.bf16.gmra.mxu0 %v859
  %v1475 = vpop.f32.mrf.mxu0
  %v1476 = vadd.f32 %v1387, %v1475
  %v1477 = vpop.f32.mrf.mxu0
  %v1478 = vadd.f32 %v1389, %v1477
  %1479 = vmatmul.bf16.gmra.mxu0 %v862
  %v1480 = vpop.f32.mrf.mxu0
  %v1481 = vadd.f32 %v1392, %v1480
  %v1482 = vpop.f32.mrf.mxu0
  %v1483 = vadd.f32 %v1394, %v1482
  %1484 = vmatmul.bf16.gmra.mxu0 %v865
  %v1485 = vpop.f32.mrf.mxu0
  %v1486 = vadd.f32 %v1397, %v1485
  %v1487 = vpop.f32.mrf.mxu0
  %v1488 = vadd.f32 %v1399, %v1487
  %1489 = vdwg.mxu0
  %v1497 = vunpack.c.l.b16 %v83
  %v1498 = vunpack.c.l.b16 %v84
  %v1499 = vunpack.c.l.b16 %v85
  %v1500 = vunpack.c.l.b16 %v86
  %v1501 = vunpack.c.l.b16 %v87
  %v1502 = vunpack.c.l.b16 %v88
  %v1503 = vunpack.c.l.b16 %v89
  %v1504 = vpack.c.b16 %v1498, %v1497
  %v1505 = vpack.c.b16 %v1500, %v1499
  %v1506 = vpack.c.b16 %v1502, %v1501
  %v1507 = vpack.c.b16 %v1503, %v1503
  %vm1511 = vcmask 400384
  %v1513 = vsel %vm1511, %v67, 0
  %v1516 = vsel %vm1511, %v68, 0
  %v1519 = vsel %vm1511, %v69, 0
  %v1522 = vsel %vm1511, %v70, 0
  %v1525 = vsel %vm1511, %v71, 0
  %v1528 = vsel %vm1511, %v72, 0
  %v1531 = vsel %vm1511, %v73, 0
  %v1534 = vsel %vm1511, %v74, 0
  %v1537 = vsel %vm1511, %v75, 0
  %v1540 = vsel %vm1511, %v76, 0
  %v1543 = vsel %vm1511, %v77, 0
  %v1546 = vsel %vm1511, %v78, 0
  %v1549 = vsel %vm1511, %v79, 0
  %v1552 = vsel %vm1511, %v80, 0
  %v1555 = vsel %vm1511, %v81, 0
  %v1558 = vsel %vm1511, %v82, 0
  %vm1560 = vcmask 1040384
  %v1561 = vsel 0, 4294967295, 65535
  %v1562 = vsel %vm1560, %v1561, 0
  %v1564 = vand.u32 %v1507, %v1562
  %1566 = vmatpush.bf16.msra.mxu0 0
  %1567 = vmatpush.bf16.msra.mxu0 0
  %1568 = vmatpush.bf16.msra.mxu0 0
  %1569 = vmatpush.bf16.msra.mxu0 0
  %1570 = vmatpush.bf16.msra.mxu0 %v1564
  %1571 = vmatpush.bf16.msra.mxu0 %v1506
  %1572 = vmatpush.bf16.msra.mxu0 %v1505
  %1573 = vmatpush.bf16.msra.mxu0 %v1504
  %1574 = vmatmul.bf16.gmra.mxu0 %v1513
  %v1575 = vpop.f32.mrf.mxu0
  %v1576 = vadd.f32 %v1411, %v1575
  %v1577 = vpop.f32.mrf.mxu0
  %v1578 = vadd.f32 %v1413, %v1577
  %1579 = vmatmul.bf16.gmra.mxu0 %v1516
  %v1580 = vpop.f32.mrf.mxu0
  %v1581 = vadd.f32 %v1416, %v1580
  %v1582 = vpop.f32.mrf.mxu0
  %v1583 = vadd.f32 %v1418, %v1582
  %1584 = vmatmul.bf16.gmra.mxu0 %v1519
  %v1585 = vpop.f32.mrf.mxu0
  %v1586 = vadd.f32 %v1421, %v1585
  %v1587 = vpop.f32.mrf.mxu0
  %v1588 = vadd.f32 %v1423, %v1587
  %1589 = vmatmul.bf16.gmra.mxu0 %v1522
  %v1590 = vpop.f32.mrf.mxu0
  %v1591 = vadd.f32 %v1426, %v1590
  %v1592 = vpop.f32.mrf.mxu0
  %v1593 = vadd.f32 %v1428, %v1592
  %1594 = vmatmul.bf16.gmra.mxu0 %v1525
  %v1595 = vpop.f32.mrf.mxu0
  %v1596 = vadd.f32 %v1431, %v1595
  %v1597 = vpop.f32.mrf.mxu0
  %v1598 = vadd.f32 %v1433, %v1597
  %1599 = vmatmul.bf16.gmra.mxu0 %v1528
  %v1600 = vpop.f32.mrf.mxu0
  %v1601 = vadd.f32 %v1436, %v1600
  %v1602 = vpop.f32.mrf.mxu0
  %v1603 = vadd.f32 %v1438, %v1602
  %1604 = vmatmul.bf16.gmra.mxu0 %v1531
  %v1605 = vpop.f32.mrf.mxu0
  %v1606 = vadd.f32 %v1441, %v1605
  %v1607 = vpop.f32.mrf.mxu0
  %v1608 = vadd.f32 %v1443, %v1607
  %1609 = vmatmul.bf16.gmra.mxu0 %v1534
  %v1610 = vpop.f32.mrf.mxu0
  %v1611 = vadd.f32 %v1446, %v1610
  %v1612 = vpop.f32.mrf.mxu0
  %v1613 = vadd.f32 %v1448, %v1612
  %1614 = vmatmul.bf16.gmra.mxu0 %v1537
  %v1615 = vpop.f32.mrf.mxu0
  %v1616 = vadd.f32 %v1451, %v1615
  %v1617 = vpop.f32.mrf.mxu0
  %v1618 = vadd.f32 %v1453, %v1617
  %1619 = vmatmul.bf16.gmra.mxu0 %v1540
  %v1620 = vpop.f32.mrf.mxu0
  %v1621 = vadd.f32 %v1456, %v1620
  %v1622 = vpop.f32.mrf.mxu0
  %v1623 = vadd.f32 %v1458, %v1622
  %1624 = vmatmul.bf16.gmra.mxu0 %v1543
  %v1625 = vpop.f32.mrf.mxu0
  %v1626 = vadd.f32 %v1461, %v1625
  %v1627 = vpop.f32.mrf.mxu0
  %v1628 = vadd.f32 %v1463, %v1627
  %1629 = vmatmul.bf16.gmra.mxu0 %v1546
  %v1630 = vpop.f32.mrf.mxu0
  %v1631 = vadd.f32 %v1466, %v1630
  %v1632 = vpop.f32.mrf.mxu0
  %v1633 = vadd.f32 %v1468, %v1632
  %1634 = vmatmul.bf16.gmra.mxu0 %v1549
  %v1635 = vpop.f32.mrf.mxu0
  %v1636 = vadd.f32 %v1471, %v1635
  %v1637 = vpop.f32.mrf.mxu0
  %v1638 = vadd.f32 %v1473, %v1637
  %1639 = vmatmul.bf16.gmra.mxu0 %v1552
  %v1640 = vpop.f32.mrf.mxu0
  %v1641 = vadd.f32 %v1476, %v1640
  %v1642 = vpop.f32.mrf.mxu0
  %v1643 = vadd.f32 %v1478, %v1642
  %1644 = vmatmul.bf16.gmra.mxu0 %v1555
  %v1645 = vpop.f32.mrf.mxu0
  %v1646 = vadd.f32 %v1481, %v1645
  %v1647 = vpop.f32.mrf.mxu0
  %v1648 = vadd.f32 %v1483, %v1647
  %1649 = vmatmul.bf16.gmra.mxu0 %v1558
  %v1650 = vpop.f32.mrf.mxu0
  %v1651 = vadd.f32 %v1486, %v1650
  %v1652 = vpop.f32.mrf.mxu0
  %v1653 = vadd.f32 %v1488, %v1652
  %1654 = vdwg.mxu0
  %v1655 = vld [vmem:[%s4] sm:$0x1]
  %v1657 = vperm.slane %v1655, 0
  %v1659 = vadd.f32 %v1576, %v1657
  %v1660 = vadd.f32 %v1578, %v1657
  %v1661 = vadd.f32 %v1581, %v1657
  %v1662 = vadd.f32 %v1583, %v1657
  %v1663 = vadd.f32 %v1586, %v1657
  %v1664 = vadd.f32 %v1588, %v1657
  %v1665 = vadd.f32 %v1591, %v1657
  %v1666 = vadd.f32 %v1593, %v1657
  %v1667 = vadd.f32 %v1596, %v1657
  %v1668 = vadd.f32 %v1598, %v1657
  %v1669 = vadd.f32 %v1601, %v1657
  %v1670 = vadd.f32 %v1603, %v1657
  %v1671 = vadd.f32 %v1606, %v1657
  %v1672 = vadd.f32 %v1608, %v1657
  %v1673 = vadd.f32 %v1611, %v1657
  %v1674 = vadd.f32 %v1613, %v1657
  %v1675 = vadd.f32 %v1616, %v1657
  %v1676 = vadd.f32 %v1618, %v1657
  %v1677 = vadd.f32 %v1621, %v1657
  %v1678 = vadd.f32 %v1623, %v1657
  %v1679 = vadd.f32 %v1626, %v1657
  %v1680 = vadd.f32 %v1628, %v1657
  %v1681 = vadd.f32 %v1631, %v1657
  %v1682 = vadd.f32 %v1633, %v1657
  %v1683 = vadd.f32 %v1636, %v1657
  %v1684 = vadd.f32 %v1638, %v1657
  %v1685 = vadd.f32 %v1641, %v1657
  %v1686 = vadd.f32 %v1643, %v1657
  %v1687 = vadd.f32 %v1646, %v1657
  %v1688 = vadd.f32 %v1648, %v1657
  %v1689 = vadd.f32 %v1651, %v1657
  %v1690 = vadd.f32 %v1653, %v1657
  %v1691 = vmul.f32 %v1659, 0.2
  %v1692 = vmul.f32 %v1660, 0.2
  %v1693 = vmul.f32 %v1661, 0.2
  %v1694 = vmul.f32 %v1662, 0.2
  %v1695 = vmul.f32 %v1663, 0.2
  %v1696 = vmul.f32 %v1664, 0.2
  %v1697 = vmul.f32 %v1665, 0.2
  %v1698 = vmul.f32 %v1666, 0.2
  %v1699 = vmul.f32 %v1667, 0.2
  %v1700 = vmul.f32 %v1668, 0.2
  %v1701 = vmul.f32 %v1669, 0.2
  %v1702 = vmul.f32 %v1670, 0.2
  %v1703 = vmul.f32 %v1671, 0.2
  %v1704 = vmul.f32 %v1672, 0.2
  %v1705 = vmul.f32 %v1673, 0.2
  %v1706 = vmul.f32 %v1674, 0.2
  %v1707 = vmul.f32 %v1675, 0.2
  %v1708 = vmul.f32 %v1676, 0.2
  %v1709 = vmul.f32 %v1677, 0.2
  %v1710 = vmul.f32 %v1678, 0.2
  %v1711 = vmul.f32 %v1679, 0.2
  %v1712 = vmul.f32 %v1680, 0.2
  %v1713 = vmul.f32 %v1681, 0.2
  %v1714 = vmul.f32 %v1682, 0.2
  %v1715 = vmul.f32 %v1683, 0.2
  %v1716 = vmul.f32 %v1684, 0.2
  %v1717 = vmul.f32 %v1685, 0.2
  %v1718 = vmul.f32 %v1686, 0.2
  %v1719 = vmul.f32 %v1687, 0.2
  %v1720 = vmul.f32 %v1688, 0.2
  %v1721 = vmul.f32 %v1689, 0.2
  %v1722 = vmul.f32 %v1690, 0.2
  %v1723 = vmax.f32 %v1659, %v1691
  %v1724 = vmax.f32 %v1660, %v1692
  %v1725 = vmax.f32 %v1661, %v1693
  %v1726 = vmax.f32 %v1662, %v1694
  %v1727 = vmax.f32 %v1663, %v1695
  %v1728 = vmax.f32 %v1664, %v1696
  %v1729 = vmax.f32 %v1665, %v1697
  %v1730 = vmax.f32 %v1666, %v1698
  %v1731 = vmax.f32 %v1667, %v1699
  %v1732 = vmax.f32 %v1668, %v1700
  %v1733 = vmax.f32 %v1669, %v1701
  %v1734 = vmax.f32 %v1670, %v1702
  %v1735 = vmax.f32 %v1671, %v1703
  %v1736 = vmax.f32 %v1672, %v1704
  %v1737 = vmax.f32 %v1673, %v1705
  %v1738 = vmax.f32 %v1674, %v1706
  %v1739 = vmax.f32 %v1675, %v1707
  %v1740 = vmax.f32 %v1676, %v1708
  %v1741 = vmax.f32 %v1677, %v1709
  %v1742 = vmax.f32 %v1678, %v1710
  %v1743 = vmax.f32 %v1679, %v1711
  %v1744 = vmax.f32 %v1680, %v1712
  %v1745 = vmax.f32 %v1681, %v1713
  %v1746 = vmax.f32 %v1682, %v1714
  %v1747 = vmax.f32 %v1683, %v1715
  %v1748 = vmax.f32 %v1684, %v1716
  %v1749 = vmax.f32 %v1685, %v1717
  %v1750 = vmax.f32 %v1686, %v1718
  %v1751 = vmax.f32 %v1687, %v1719
  %v1752 = vmax.f32 %v1688, %v1720
  %v1753 = vmax.f32 %v1689, %v1721
  %v1754 = vmax.f32 %v1690, %v1722
  %v1755 = vpack.c.bf16 %v1724, %v1723
  %v1756 = vpack.c.bf16 %v1726, %v1725
  %v1757 = vpack.c.bf16 %v1728, %v1727
  %v1758 = vpack.c.bf16 %v1730, %v1729
  %v1759 = vpack.c.bf16 %v1732, %v1731
  %v1760 = vpack.c.bf16 %v1734, %v1733
  %v1761 = vpack.c.bf16 %v1736, %v1735
  %v1762 = vpack.c.bf16 %v1738, %v1737
  %v1763 = vpack.c.bf16 %v1740, %v1739
  %v1764 = vpack.c.bf16 %v1742, %v1741
  %v1765 = vpack.c.bf16 %v1744, %v1743
  %v1766 = vpack.c.bf16 %v1746, %v1745
  %v1767 = vpack.c.bf16 %v1748, %v1747
  %v1768 = vpack.c.bf16 %v1750, %v1749
  %v1769 = vpack.c.bf16 %v1752, %v1751
  %v1770 = vpack.c.bf16 %v1754, %v1753
  %v1771 = vld [vmem:[%s5] sm:$0xf]
  %v1772 = vld [vmem:[%s5 + $0x4] sm:$0xf]
  %v1773 = vld [vmem:[%s5 + $0x8] sm:$0xf]
  %v1774 = vld [vmem:[%s5 + $0xc] sm:$0xf]
  %v1775 = vld [vmem:[%s5 + $0x10] sm:$0xf]
  %v1776 = vld [vmem:[%s5 + $0x14] sm:$0xf]
  %v1777 = vld [vmem:[%s5 + $0x18] sm:$0xf]
  %v1778 = vld [vmem:[%s5 + $0x1c] sm:$0xf]
  %v1779 = vld [vmem:[%s5 + $0x20] sm:$0xf]
  %v1780 = vld [vmem:[%s5 + $0x24] sm:$0xf]
  %v1781 = vld [vmem:[%s5 + $0x28] sm:$0xf]
  %v1782 = vld [vmem:[%s5 + $0x2c] sm:$0xf]
  %v1783 = vld [vmem:[%s5 + $0x30] sm:$0xf]
  %v1784 = vld [vmem:[%s5 + $0x34] sm:$0xf]
  %v1785 = vld [vmem:[%s5 + $0x38] sm:$0xf]
  %v1786 = vld [vmem:[%s5 + $0x3c] sm:$0xf]
  %v1787 = vld [vmem:[%s6] sm:$0x1]
  %v1789 = vperm.slane %v1787, 0
  %v1807 = vunpack.c.l.b16 %v1771
  %v1808 = vunpack.c.l.b16 %v1772
  %v1809 = vunpack.c.l.b16 %v1773
  %v1810 = vunpack.c.l.b16 %v1774
  %v1811 = vunpack.c.l.b16 %v1775
  %v1812 = vunpack.c.l.b16 %v1776
  %v1813 = vunpack.c.l.b16 %v1777
  %v1814 = vunpack.c.l.b16 %v1778
  %v1815 = vunpack.c.l.b16 %v1779
  %v1816 = vunpack.c.l.b16 %v1780
  %v1817 = vunpack.c.l.b16 %v1781
  %v1818 = vunpack.c.l.b16 %v1782
  %v1819 = vunpack.c.l.b16 %v1783
  %v1820 = vunpack.c.l.b16 %v1784
  %v1821 = vunpack.c.l.b16 %v1785
  %v1822 = vunpack.c.l.b16 %v1786
  %v1823 = vpack.c.b16 %v1808, %v1807
  %v1824 = vpack.c.b16 %v1810, %v1809
  %v1825 = vpack.c.b16 %v1812, %v1811
  %v1826 = vpack.c.b16 %v1814, %v1813
  %v1827 = vpack.c.b16 %v1816, %v1815
  %v1828 = vpack.c.b16 %v1818, %v1817
  %v1829 = vpack.c.b16 %v1820, %v1819
  %v1830 = vpack.c.b16 %v1822, %v1821
  %1839 = vmatpush.bf16.msra.mxu0 %v1830
  %1840 = vmatpush.bf16.msra.mxu0 %v1829
  %1841 = vmatpush.bf16.msra.mxu0 %v1828
  %1842 = vmatpush.bf16.msra.mxu0 %v1827
  %1843 = vmatpush.bf16.msra.mxu0 %v1826
  %1844 = vmatpush.bf16.msra.mxu0 %v1825
  %1845 = vmatpush.bf16.msra.mxu0 %v1824
  %1846 = vmatpush.bf16.msra.mxu0 %v1823
  %1847 = vmatmul.bf16.gmra.mxu0 %v1755
  %v1848 = vpop.f32.mrf.mxu0
  %v1849 = vadd.f32 %v1789, %v1848
  %v1850 = vpop.f32.mrf.mxu0
  %v1851 = vadd.f32 %v1789, %v1850
  %1852 = vmatmul.bf16.gmra.mxu0 %v1756
  %v1853 = vpop.f32.mrf.mxu0
  %v1854 = vadd.f32 %v1789, %v1853
  %v1855 = vpop.f32.mrf.mxu0
  %v1856 = vadd.f32 %v1789, %v1855
  %1857 = vmatmul.bf16.gmra.mxu0 %v1757
  %v1858 = vpop.f32.mrf.mxu0
  %v1859 = vadd.f32 %v1789, %v1858
  %v1860 = vpop.f32.mrf.mxu0
  %v1861 = vadd.f32 %v1789, %v1860
  %1862 = vmatmul.bf16.gmra.mxu0 %v1758
  %v1863 = vpop.f32.mrf.mxu0
  %v1864 = vadd.f32 %v1789, %v1863
  %v1865 = vpop.f32.mrf.mxu0
  %v1866 = vadd.f32 %v1789, %v1865
  %1867 = vmatmul.bf16.gmra.mxu0 %v1759
  %v1868 = vpop.f32.mrf.mxu0
  %v1869 = vadd.f32 %v1789, %v1868
  %v1870 = vpop.f32.mrf.mxu0
  %v1871 = vadd.f32 %v1789, %v1870
  %1872 = vmatmul.bf16.gmra.mxu0 %v1760
  %v1873 = vpop.f32.mrf.mxu0
  %v1874 = vadd.f32 %v1789, %v1873
  %v1875 = vpop.f32.mrf.mxu0
  %v1876 = vadd.f32 %v1789, %v1875
  %1877 = vmatmul.bf16.gmra.mxu0 %v1761
  %v1878 = vpop.f32.mrf.mxu0
  %v1879 = vadd.f32 %v1789, %v1878
  %v1880 = vpop.f32.mrf.mxu0
  %v1881 = vadd.f32 %v1789, %v1880
  %1882 = vmatmul.bf16.gmra.mxu0 %v1762
  %v1883 = vpop.f32.mrf.mxu0
  %v1884 = vadd.f32 %v1789, %v1883
  %v1885 = vpop.f32.mrf.mxu0
  %v1886 = vadd.f32 %v1789, %v1885
  %1887 = vmatmul.bf16.gmra.mxu0 %v1763
  %v1888 = vpop.f32.mrf.mxu0
  %v1889 = vadd.f32 %v1789, %v1888
  %v1890 = vpop.f32.mrf.mxu0
  %v1891 = vadd.f32 %v1789, %v1890
  %1892 = vmatmul.bf16.gmra.mxu0 %v1764
  %v1893 = vpop.f32.mrf.mxu0
  %v1894 = vadd.f32 %v1789, %v1893
  %v1895 = vpop.f32.mrf.mxu0
  %v1896 = vadd.f32 %v1789, %v1895
  %1897 = vmatmul.bf16.gmra.mxu0 %v1765
  %v1898 = vpop.f32.mrf.mxu0
  %v1899 = vadd.f32 %v1789, %v1898
  %v1900 = vpop.f32.mrf.mxu0
  %v1901 = vadd.f32 %v1789, %v1900
  %1902 = vmatmul.bf16.gmra.mxu0 %v1766
  %v1903 = vpop.f32.mrf.mxu0
  %v1904 = vadd.f32 %v1789, %v1903
  %v1905 = vpop.f32.mrf.mxu0
  %v1906 = vadd.f32 %v1789, %v1905
  %1907 = vmatmul.bf16.gmra.mxu0 %v1767
  %v1908 = vpop.f32.mrf.mxu0
  %v1909 = vadd.f32 %v1789, %v1908
  %v1910 = vpop.f32.mrf.mxu0
  %v1911 = vadd.f32 %v1789, %v1910
  %1912 = vmatmul.bf16.gmra.mxu0 %v1768
  %v1913 = vpop.f32.mrf.mxu0
  %v1914 = vadd.f32 %v1789, %v1913
  %v1915 = vpop.f32.mrf.mxu0
  %v1916 = vadd.f32 %v1789, %v1915
  %1917 = vmatmul.bf16.gmra.mxu0 %v1769
  %v1918 = vpop.f32.mrf.mxu0
  %v1919 = vadd.f32 %v1789, %v1918
  %v1920 = vpop.f32.mrf.mxu0
  %v1921 = vadd.f32 %v1789, %v1920
  %1922 = vmatmul.bf16.gmra.mxu0 %v1770
  %v1923 = vpop.f32.mrf.mxu0
  %v1924 = vadd.f32 %v1789, %v1923
  %v1925 = vpop.f32.mrf.mxu0
  %v1926 = vadd.f32 %v1789, %v1925
  %1927 = vdwg.mxu0
  %v1928 = vmul.f32 %v1849, 0.2
  %v1929 = vmul.f32 %v1851, 0.2
  %v1930 = vmul.f32 %v1854, 0.2
  %v1931 = vmul.f32 %v1856, 0.2
  %v1932 = vmul.f32 %v1859, 0.2
  %v1933 = vmul.f32 %v1861, 0.2
  %v1934 = vmul.f32 %v1864, 0.2
  %v1935 = vmul.f32 %v1866, 0.2
  %v1936 = vmul.f32 %v1869, 0.2
  %v1937 = vmul.f32 %v1871, 0.2
  %v1938 = vmul.f32 %v1874, 0.2
  %v1939 = vmul.f32 %v1876, 0.2
  %v1940 = vmul.f32 %v1879, 0.2
  %v1941 = vmul.f32 %v1881, 0.2
  %v1942 = vmul.f32 %v1884, 0.2
  %v1943 = vmul.f32 %v1886, 0.2
  %v1944 = vmul.f32 %v1889, 0.2
  %v1945 = vmul.f32 %v1891, 0.2
  %v1946 = vmul.f32 %v1894, 0.2
  %v1947 = vmul.f32 %v1896, 0.2
  %v1948 = vmul.f32 %v1899, 0.2
  %v1949 = vmul.f32 %v1901, 0.2
  %v1950 = vmul.f32 %v1904, 0.2
  %v1951 = vmul.f32 %v1906, 0.2
  %v1952 = vmul.f32 %v1909, 0.2
  %v1953 = vmul.f32 %v1911, 0.2
  %v1954 = vmul.f32 %v1914, 0.2
  %v1955 = vmul.f32 %v1916, 0.2
  %v1956 = vmul.f32 %v1919, 0.2
  %v1957 = vmul.f32 %v1921, 0.2
  %v1958 = vmul.f32 %v1924, 0.2
  %v1959 = vmul.f32 %v1926, 0.2
  %v1960 = vmax.f32 %v1849, %v1928
  %v1961 = vmax.f32 %v1851, %v1929
  %v1962 = vmax.f32 %v1854, %v1930
  %v1963 = vmax.f32 %v1856, %v1931
  %v1964 = vmax.f32 %v1859, %v1932
  %v1965 = vmax.f32 %v1861, %v1933
  %v1966 = vmax.f32 %v1864, %v1934
  %v1967 = vmax.f32 %v1866, %v1935
  %v1968 = vmax.f32 %v1869, %v1936
  %v1969 = vmax.f32 %v1871, %v1937
  %v1970 = vmax.f32 %v1874, %v1938
  %v1971 = vmax.f32 %v1876, %v1939
  %v1972 = vmax.f32 %v1879, %v1940
  %v1973 = vmax.f32 %v1881, %v1941
  %v1974 = vmax.f32 %v1884, %v1942
  %v1975 = vmax.f32 %v1886, %v1943
  %v1976 = vmax.f32 %v1889, %v1944
  %v1977 = vmax.f32 %v1891, %v1945
  %v1978 = vmax.f32 %v1894, %v1946
  %v1979 = vmax.f32 %v1896, %v1947
  %v1980 = vmax.f32 %v1899, %v1948
  %v1981 = vmax.f32 %v1901, %v1949
  %v1982 = vmax.f32 %v1904, %v1950
  %v1983 = vmax.f32 %v1906, %v1951
  %v1984 = vmax.f32 %v1909, %v1952
  %v1985 = vmax.f32 %v1911, %v1953
  %v1986 = vmax.f32 %v1914, %v1954
  %v1987 = vmax.f32 %v1916, %v1955
  %v1988 = vmax.f32 %v1919, %v1956
  %v1989 = vmax.f32 %v1921, %v1957
  %v1990 = vmax.f32 %v1924, %v1958
  %v1991 = vmax.f32 %v1926, %v1959
  %v1992 = vld [vmem:[%s7] sm:$0x1]
  %v1994 = vperm.slane %v1992, 0
  %v1996 = vmul.f32 %v1960, %v1994
  %v1997 = vmul.f32 %v1961, %v1994
  %v1998 = vmul.f32 %v1962, %v1994
  %v1999 = vmul.f32 %v1963, %v1994
  %v2000 = vmul.f32 %v1964, %v1994
  %v2001 = vmul.f32 %v1965, %v1994
  %v2002 = vmul.f32 %v1966, %v1994
  %v2003 = vmul.f32 %v1967, %v1994
  %v2004 = vmul.f32 %v1968, %v1994
  %v2005 = vmul.f32 %v1969, %v1994
  %v2006 = vmul.f32 %v1970, %v1994
  %v2007 = vmul.f32 %v1971, %v1994
  %v2008 = vmul.f32 %v1972, %v1994
  %v2009 = vmul.f32 %v1973, %v1994
  %v2010 = vmul.f32 %v1974, %v1994
  %v2011 = vmul.f32 %v1975, %v1994
  %v2012 = vmul.f32 %v1976, %v1994
  %v2013 = vmul.f32 %v1977, %v1994
  %v2014 = vmul.f32 %v1978, %v1994
  %v2015 = vmul.f32 %v1979, %v1994
  %v2016 = vmul.f32 %v1980, %v1994
  %v2017 = vmul.f32 %v1981, %v1994
  %v2018 = vmul.f32 %v1982, %v1994
  %v2019 = vmul.f32 %v1983, %v1994
  %v2020 = vmul.f32 %v1984, %v1994
  %v2021 = vmul.f32 %v1985, %v1994
  %v2022 = vmul.f32 %v1986, %v1994
  %v2023 = vmul.f32 %v1987, %v1994
  %v2024 = vmul.f32 %v1988, %v1994
  %v2025 = vmul.f32 %v1989, %v1994
  %v2026 = vmul.f32 %v1990, %v1994
  %v2027 = vmul.f32 %v1991, %v1994
  %2028 = vadd.xlane.f32.xlu0 %v1996
  %v2029 = vpop.xlane.xlu0 %2028
  %2030 = vadd.xlane.f32.xlu0 %v1997
  %v2031 = vpop.xlane.xlu0 %2030
  %2032 = vadd.xlane.f32.xlu0 %v1998
  %v2033 = vpop.xlane.xlu0 %2032
  %2034 = vadd.xlane.f32.xlu0 %v1999
  %v2035 = vpop.xlane.xlu0 %2034
  %2036 = vadd.xlane.f32.xlu0 %v2000
  %v2037 = vpop.xlane.xlu0 %2036
  %2038 = vadd.xlane.f32.xlu0 %v2001
  %v2039 = vpop.xlane.xlu0 %2038
  %2040 = vadd.xlane.f32.xlu0 %v2002
  %v2041 = vpop.xlane.xlu0 %2040
  %2042 = vadd.xlane.f32.xlu0 %v2003
  %v2043 = vpop.xlane.xlu0 %2042
  %2044 = vadd.xlane.f32.xlu0 %v2004
  %v2045 = vpop.xlane.xlu0 %2044
  %2046 = vadd.xlane.f32.xlu0 %v2005
  %v2047 = vpop.xlane.xlu0 %2046
  %2048 = vadd.xlane.f32.xlu0 %v2006
  %v2049 = vpop.xlane.xlu0 %2048
  %2050 = vadd.xlane.f32.xlu0 %v2007
  %v2051 = vpop.xlane.xlu0 %2050
  %2052 = vadd.xlane.f32.xlu0 %v2008
  %v2053 = vpop.xlane.xlu0 %2052
  %2054 = vadd.xlane.f32.xlu0 %v2009
  %v2055 = vpop.xlane.xlu0 %2054
  %2056 = vadd.xlane.f32.xlu0 %v2010
  %v2057 = vpop.xlane.xlu0 %2056
  %2058 = vadd.xlane.f32.xlu0 %v2011
  %v2059 = vpop.xlane.xlu0 %2058
  %2060 = vadd.xlane.f32.xlu0 %v2012
  %v2061 = vpop.xlane.xlu0 %2060
  %2062 = vadd.xlane.f32.xlu0 %v2013
  %v2063 = vpop.xlane.xlu0 %2062
  %2064 = vadd.xlane.f32.xlu0 %v2014
  %v2065 = vpop.xlane.xlu0 %2064
  %2066 = vadd.xlane.f32.xlu0 %v2015
  %v2067 = vpop.xlane.xlu0 %2066
  %2068 = vadd.xlane.f32.xlu0 %v2016
  %v2069 = vpop.xlane.xlu0 %2068
  %2070 = vadd.xlane.f32.xlu0 %v2017
  %v2071 = vpop.xlane.xlu0 %2070
  %2072 = vadd.xlane.f32.xlu0 %v2018
  %v2073 = vpop.xlane.xlu0 %2072
  %2074 = vadd.xlane.f32.xlu0 %v2019
  %v2075 = vpop.xlane.xlu0 %2074
  %2076 = vadd.xlane.f32.xlu0 %v2020
  %v2077 = vpop.xlane.xlu0 %2076
  %2078 = vadd.xlane.f32.xlu0 %v2021
  %v2079 = vpop.xlane.xlu0 %2078
  %2080 = vadd.xlane.f32.xlu0 %v2022
  %v2081 = vpop.xlane.xlu0 %2080
  %2082 = vadd.xlane.f32.xlu0 %v2023
  %v2083 = vpop.xlane.xlu0 %2082
  %2084 = vadd.xlane.f32.xlu0 %v2024
  %v2085 = vpop.xlane.xlu0 %2084
  %2086 = vadd.xlane.f32.xlu0 %v2025
  %v2087 = vpop.xlane.xlu0 %2086
  %2088 = vadd.xlane.f32.xlu0 %v2026
  %v2089 = vpop.xlane.xlu0 %2088
  %2090 = vadd.xlane.f32.xlu0 %v2027
  %v2091 = vpop.xlane.xlu0 %2090
  %v2092 = vld [vmem:[#allocation2] sm:$0x1]
  %v2094 = vperm.slane %v2092, 0
  %v2096 = vadd.f32 %v2029, %v2094
  %v2097 = vadd.f32 %v2031, %v2094
  %v2098 = vadd.f32 %v2033, %v2094
  %v2099 = vadd.f32 %v2035, %v2094
  %v2100 = vadd.f32 %v2037, %v2094
  %v2101 = vadd.f32 %v2039, %v2094
  %v2102 = vadd.f32 %v2041, %v2094
  %v2103 = vadd.f32 %v2043, %v2094
  %v2104 = vadd.f32 %v2045, %v2094
  %v2105 = vadd.f32 %v2047, %v2094
  %v2106 = vadd.f32 %v2049, %v2094
  %v2107 = vadd.f32 %v2051, %v2094
  %v2108 = vadd.f32 %v2053, %v2094
  %v2109 = vadd.f32 %v2055, %v2094
  %v2110 = vadd.f32 %v2057, %v2094
  %v2111 = vadd.f32 %v2059, %v2094
  %v2112 = vadd.f32 %v2061, %v2094
  %v2113 = vadd.f32 %v2063, %v2094
  %v2114 = vadd.f32 %v2065, %v2094
  %v2115 = vadd.f32 %v2067, %v2094
  %v2116 = vadd.f32 %v2069, %v2094
  %v2117 = vadd.f32 %v2071, %v2094
  %v2118 = vadd.f32 %v2073, %v2094
  %v2119 = vadd.f32 %v2075, %v2094
  %v2120 = vadd.f32 %v2077, %v2094
  %v2121 = vadd.f32 %v2079, %v2094
  %v2122 = vadd.f32 %v2081, %v2094
  %v2123 = vadd.f32 %v2083, %v2094
  %v2124 = vadd.f32 %v2085, %v2094
  %v2125 = vadd.f32 %v2087, %v2094
  %v2126 = vadd.f32 %v2089, %v2094
  %v2127 = vadd.f32 %v2091, %v2094
  %v2128 = vmul.f32 %v2096, 0.2
  %v2129 = vmul.f32 %v2097, 0.2
  %v2130 = vmul.f32 %v2098, 0.2
  %v2131 = vmul.f32 %v2099, 0.2
  %v2132 = vmul.f32 %v2100, 0.2
  %v2133 = vmul.f32 %v2101, 0.2
  %v2134 = vmul.f32 %v2102, 0.2
  %v2135 = vmul.f32 %v2103, 0.2
  %v2136 = vmul.f32 %v2104, 0.2
  %v2137 = vmul.f32 %v2105, 0.2
  %v2138 = vmul.f32 %v2106, 0.2
  %v2139 = vmul.f32 %v2107, 0.2
  %v2140 = vmul.f32 %v2108, 0.2
  %v2141 = vmul.f32 %v2109, 0.2
  %v2142 = vmul.f32 %v2110, 0.2
  %v2143 = vmul.f32 %v2111, 0.2
  %v2144 = vmul.f32 %v2112, 0.2
  %v2145 = vmul.f32 %v2113, 0.2
  %v2146 = vmul.f32 %v2114, 0.2
  %v2147 = vmul.f32 %v2115, 0.2
  %v2148 = vmul.f32 %v2116, 0.2
  %v2149 = vmul.f32 %v2117, 0.2
  %v2150 = vmul.f32 %v2118, 0.2
  %v2151 = vmul.f32 %v2119, 0.2
  %v2152 = vmul.f32 %v2120, 0.2
  %v2153 = vmul.f32 %v2121, 0.2
  %v2154 = vmul.f32 %v2122, 0.2
  %v2155 = vmul.f32 %v2123, 0.2
  %v2156 = vmul.f32 %v2124, 0.2
  %v2157 = vmul.f32 %v2125, 0.2
  %v2158 = vmul.f32 %v2126, 0.2
  %v2159 = vmul.f32 %v2127, 0.2
  %v2160 = vmax.f32 %v2096, %v2128
  %v2161 = vmax.f32 %v2097, %v2129
  %v2162 = vmax.f32 %v2098, %v2130
  %v2163 = vmax.f32 %v2099, %v2131
  %v2164 = vmax.f32 %v2100, %v2132
  %v2165 = vmax.f32 %v2101, %v2133
  %v2166 = vmax.f32 %v2102, %v2134
  %v2167 = vmax.f32 %v2103, %v2135
  %v2168 = vmax.f32 %v2104, %v2136
  %v2169 = vmax.f32 %v2105, %v2137
  %v2170 = vmax.f32 %v2106, %v2138
  %v2171 = vmax.f32 %v2107, %v2139
  %v2172 = vmax.f32 %v2108, %v2140
  %v2173 = vmax.f32 %v2109, %v2141
  %v2174 = vmax.f32 %v2110, %v2142
  %v2175 = vmax.f32 %v2111, %v2143
  %v2176 = vmax.f32 %v2112, %v2144
  %v2177 = vmax.f32 %v2113, %v2145
  %v2178 = vmax.f32 %v2114, %v2146
  %v2179 = vmax.f32 %v2115, %v2147
  %v2180 = vmax.f32 %v2116, %v2148
  %v2181 = vmax.f32 %v2117, %v2149
  %v2182 = vmax.f32 %v2118, %v2150
  %v2183 = vmax.f32 %v2119, %v2151
  %v2184 = vmax.f32 %v2120, %v2152
  %v2185 = vmax.f32 %v2121, %v2153
  %v2186 = vmax.f32 %v2122, %v2154
  %v2187 = vmax.f32 %v2123, %v2155
  %v2188 = vmax.f32 %v2124, %v2156
  %v2189 = vmax.f32 %v2125, %v2157
  %v2190 = vmax.f32 %v2126, %v2158
  %v2191 = vmax.f32 %v2127, %v2159
  %vm2192 = vcmask 7168
  %2193 = vst.msk [vmem:[%s9] sm:$0xff] %vm2192, %v2160
  %2194 = vst.msk [vmem:[%s9 + $0x8] sm:$0xff] %vm2192, %v2161
  %2195 = vst.msk [vmem:[%s9 + $0x10] sm:$0xff] %vm2192, %v2162
  %2196 = vst.msk [vmem:[%s9 + $0x18] sm:$0xff] %vm2192, %v2163
  %2197 = vst.msk [vmem:[%s9 + $0x20] sm:$0xff] %vm2192, %v2164
  %2198 = vst.msk [vmem:[%s9 + $0x28] sm:$0xff] %vm2192, %v2165
  %2199 = vst.msk [vmem:[%s9 + $0x30] sm:$0xff] %vm2192, %v2166
  %2200 = vst.msk [vmem:[%s9 + $0x38] sm:$0xff] %vm2192, %v2167
  %2201 = vst.msk [vmem:[%s9 + $0x40] sm:$0xff] %vm2192, %v2168
  %2202 = vst.msk [vmem:[%s9 + $0x48] sm:$0xff] %vm2192, %v2169
  %2203 = vst.msk [vmem:[%s9 + $0x50] sm:$0xff] %vm2192, %v2170
  %2204 = vst.msk [vmem:[%s9 + $0x58] sm:$0xff] %vm2192, %v2171
  %2205 = vst.msk [vmem:[%s9 + $0x60] sm:$0xff] %vm2192, %v2172
  %2206 = vst.msk [vmem:[%s9 + $0x68] sm:$0xff] %vm2192, %v2173
  %2207 = vst.msk [vmem:[%s9 + $0x70] sm:$0xff] %vm2192, %v2174
  %2208 = vst.msk [vmem:[%s9 + $0x78] sm:$0xff] %vm2192, %v2175
  %2209 = vst.msk [vmem:[%s9 + $0x80] sm:$0xff] %vm2192, %v2176
  %2210 = vst.msk [vmem:[%s9 + $0x88] sm:$0xff] %vm2192, %v2177
  %2211 = vst.msk [vmem:[%s9 + $0x90] sm:$0xff] %vm2192, %v2178
  %2212 = vst.msk [vmem:[%s9 + $0x98] sm:$0xff] %vm2192, %v2179
  %2213 = vst.msk [vmem:[%s9 + $0xa0] sm:$0xff] %vm2192, %v2180
  %2214 = vst.msk [vmem:[%s9 + $0xa8] sm:$0xff] %vm2192, %v2181
  %2215 = vst.msk [vmem:[%s9 + $0xb0] sm:$0xff] %vm2192, %v2182
  %2216 = vst.msk [vmem:[%s9 + $0xb8] sm:$0xff] %vm2192, %v2183
  %2217 = vst.msk [vmem:[%s9 + $0xc0] sm:$0xff] %vm2192, %v2184
  %2218 = vst.msk [vmem:[%s9 + $0xc8] sm:$0xff] %vm2192, %v2185
  %2219 = vst.msk [vmem:[%s9 + $0xd0] sm:$0xff] %vm2192, %v2186
  %2220 = vst.msk [vmem:[%s9 + $0xd8] sm:$0xff] %vm2192, %v2187
  %2221 = vst.msk [vmem:[%s9 + $0xe0] sm:$0xff] %vm2192, %v2188
  %2222 = vst.msk [vmem:[%s9 + $0xe8] sm:$0xff] %vm2192, %v2189
  %2223 = vst.msk [vmem:[%s9 + $0xf0] sm:$0xff] %vm2192, %v2190
  %2224 = vst.msk [vmem:[%s9 + $0xf8] sm:$0xff] %vm2192, %v2191
  // Predicated region
  $region38: #{mine1_forward.1} parent=0 // pred_check
    _
  $region39: #{mine1_forward.1} parent=0 // pred_check_branch
    %2226 = sbr.rel (0) target = $region41
  $region40: #{mine1_forward.1} parent=0 // pred_region
    _
  $region41: #{mine1_forward.1} parent=0 // pred_fallthru
    _
  // Predicated region
  $region42: #{mine1_forward.1} parent=0 // pred_check
    _
  $region43: #{mine1_forward.1} parent=0 // pred_check_branch
    %2228 = sbr.rel (0) target = $region45
  $region44: #{mine1_forward.1} parent=0 // pred_region
    _
  $region45: #{mine1_forward.1} parent=0 // pred_fallthru
    _

</llo_original>
